<compile_context>
chip_gen: v7x
topology: tpu7x:2x2x1
jax: 0.10.0
libtpu: 0.0.40
codegen_flags: <defaults>
</compile_context>

<pallas_src>
import jax
import jax.numpy as jnp
from jax.experimental import pallas as pl
from jax.experimental.pallas import tpu as pltpu

BN_EPS = 1e-3   # nn.BatchNorm1d(..., eps=0.001)
LN_EPS = 1e-5   # nn.LayerNorm default eps


def _round_up(x, m):
    return ((x + m - 1) // m) * m


def _pick_tn(n, d_last, out_dim, wf_itemsize, *, max_tn=16384,
             vmem_budget_bytes=12 * 1024 * 1024):
    """Largest lane-dense column tile (multiple of 128) whose double-buffered
    working set (weight + bias + output tiles) fits the VMEM budget.
    No divisibility requirement: the grid uses pl.cdiv and Pallas masks the
    ragged last tile."""
    per_lane = (2 * d_last * wf_itemsize   # wf tile, double-buffered
                + 2 * n * 4                # f32 output tile, double-buffered
                + 2 * 1 * 4)               # f32 bias tile, double-buffered
    per_tile128 = per_lane * 128
    cap = min(max_tn, _round_up(out_dim, 128))
    tn = max(128, (vmem_budget_bytes // per_tile128) * 128)
    return int(min(tn, cap))


# ---------------------------------------------------------------------------
# Kernel 1: hidden stack (Linear -> BN(batch stats) -> LN -> ReLU), run ONCE.
# ---------------------------------------------------------------------------
def _make_hidden_kernel(num_layers):
    def kernel(*refs):
        z_ref = refs[0]
        layer_refs = refs[1:1 + 4 * num_layers]
        h_ref = refs[1 + 4 * num_layers]

        h = z_ref[...]
        for i in range(num_layers):
            w = layer_refs[4 * i][...]
            b = layer_refs[4 * i + 1][...]
            gamma = layer_refs[4 * i + 2][...]
            beta = layer_refs[4 * i + 3][...]

            # Linear (f32 accumulate on MXU).
            y = jnp.dot(h, w, preferred_element_type=jnp.float32) + b

            # BatchNorm1d, training mode: biased variance over the batch axis,
            # eps=1e-3, affine folded into a single scale/shift.
            # NOTE: statistics use the FULL batch (batch axis is never tiled).
            mu_b = jnp.mean(y, axis=0, keepdims=True)
            var_b = jnp.mean((y - mu_b) ** 2, axis=0, keepdims=True)
            s = gamma * jax.lax.rsqrt(var_b + BN_EPS)
            y = y * s + (beta - mu_b * s)

            # LayerNorm (elementwise_affine=False): per-row over features.
            mu_l = jnp.mean(y, axis=-1, keepdims=True)
            var_l = jnp.mean((y - mu_l) ** 2, axis=-1, keepdims=True)
            y = (y - mu_l) * jax.lax.rsqrt(var_l + LN_EPS)

            # ReLU (Dropout(p=0) is the identity).
            h = jnp.maximum(y, 0.0)

        h_ref[...] = h

    return kernel


# ---------------------------------------------------------------------------
# Kernel 2: final Linear (bf16 weights, f32 acc) + sigmoid, tiled over out_dim.
# ---------------------------------------------------------------------------
def _final_kernel(h_ref, wf_ref, bf_ref, o_ref):
    y = jnp.dot(h_ref[...].astype(wf_ref.dtype), wf_ref[...],
                preferred_element_type=jnp.float32)
    y = y + bf_ref[...].astype(jnp.float32)
    o_ref[...] = jax.nn.sigmoid(y).astype(o_ref.dtype)


def _full_spec(shape):
    zeros = (0,) * len(shape)
    return pl.BlockSpec(shape, lambda i, _z=zeros: _z)


def adj_decoder_forward(params, z, *, max_tn=16384):
    """Adj_Decoder forward: hidden stack once, then out_dim-tiled final layer."""
    layers = params["layers"]
    wf, bf = params["final"]
    n, _ = z.shape
    d_last, out_dim = wf.shape
    num_layers = len(layers)

    # ----- stage 1: hidden stack, computed once (tiny) -----------------------
    flat_hidden = [z]
    for (w, b, gamma, beta) in layers:
        flat_hidden += [w, b, gamma, beta]
    hidden_flops = 2 * n * sum(w.shape[0] * w.shape[1] for (w, *_r) in layers)
    hidden_bytes = (sum(int(a.size) * a.dtype.itemsize for a in flat_hidden)
                    + n * d_last * 4)

    h = pl.pallas_call(
        _make_hidden_kernel(num_layers),
        out_shape=jax.ShapeDtypeStruct((n, d_last), jnp.float32),
        grid_spec=pltpu.PrefetchScalarGridSpec(
            num_scalar_prefetch=0,
            grid=(1,),
            in_specs=[_full_spec(a.shape) for a in flat_hidden],
            out_specs=_full_spec((n, d_last)),
        ),
        compiler_params=pltpu.CompilerParams(
            dimension_semantics=("arbitrary",),
            vmem_limit_bytes=32 * 1024 * 1024,
        ),
        cost_estimate=pl.CostEstimate(
            flops=hidden_flops, transcendentals=0, bytes_accessed=hidden_bytes),
    )(*flat_hidden)

    # ----- stage 2: final Linear + sigmoid, lane-dense tiles over out_dim ----
    tn = _pick_tn(n, d_last, out_dim, wf.dtype.itemsize, max_tn=max_tn)
    grid_g = pl.cdiv(out_dim, tn)   # ragged last tile handled by Pallas masking

    in_specs = [
        # h is resident: same block index every step -> DMA'd once, kept in VMEM.
        pl.BlockSpec((n, d_last), lambda j: (0, 0)),
        # Streamed weight / bias column tiles.
        # TODO(synk): sweep pipeline_mode=pl.Buffered(3) on the weight spec once
        # profiled; and consider fp8 (v7x) / int8 (v5e,v6e) weight storage with
        # per-column dequant scales if the fidelity budget allows.
        pl.BlockSpec((d_last, tn), lambda j: (0, j)),
        pl.BlockSpec((1, tn), lambda j: (0, j)),
    ]
    out_specs = pl.BlockSpec((n, tn), lambda j: (0, j))

    final_flops = 2 * n * d_last * out_dim
    final_bytes = (n * d_last * 4
                   + int(wf.size) * wf.dtype.itemsize
                   + int(bf.size) * bf.dtype.itemsize
                   + n * out_dim * 4)

    return pl.pallas_call(
        _final_kernel,
        out_shape=jax.ShapeDtypeStruct((n, out_dim), jnp.float32),
        grid_spec=pltpu.PrefetchScalarGridSpec(
            num_scalar_prefetch=0,
            grid=(grid_g,),
            in_specs=in_specs,
            out_specs=out_specs,
        ),
        compiler_params=pltpu.CompilerParams(
            # Column tiles are fully independent (no cross-step scratch), so the
            # axis is parallel.  TODO(synk): on v7x try pltpu.CORE_PARALLEL here
            # to guarantee 2-TC sharding of the column tiles.
            dimension_semantics=("parallel",),
            # TN is budgeted to ~12 MiB of double-buffered tiles, so 32 MiB
            # leaves headroom on v7x's 64 MiB physical VMEM.
            vmem_limit_bytes=32 * 1024 * 1024,
        ),
        cost_estimate=pl.CostEstimate(
            flops=final_flops,
            transcendentals=n * out_dim,       # sigmoid (EUP)
            bytes_accessed=final_bytes,
        ),
    )(h, wf, bf)


adj_decoder_forward_jit = jax.jit(adj_decoder_forward, static_argnames=("max_tn",))


# ---------------------------------------------------------------------------
# Parameter init (matches the module's parameter shapes) + pure-JAX reference
# ---------------------------------------------------------------------------
def init_params(key, z_dim, hidden_dim, out_dim):
    hidden_dim_decoder = list(hidden_dim)[::-1]
    params = {"layers": [], "final": None}
    d_in = z_dim
    for h in hidden_dim_decoder:
        key, kw, kb = jax.random.split(key, 3)
        bound = 1.0 / (d_in ** 0.5)
        w = jax.random.uniform(kw, (d_in, h), jnp.float32, -bound, bound)
        b = jax.random.uniform(kb, (1, h), jnp.float32, -bound, bound)
        gamma = jnp.ones((1, h), jnp.float32)   # BatchNorm1d weight init
        beta = jnp.zeros((1, h), jnp.float32)   # BatchNorm1d bias init
        params["layers"].append((w, b, gamma, beta))
        d_in = h
    key, kw, kb = jax.random.split(key, 3)
    bound = 1.0 / (d_in ** 0.5)
    wf = jax.random.uniform(kw, (d_in, out_dim), jnp.float32, -bound, bound)
    wf = wf.astype(jnp.bfloat16)   # mem-bound final layer: halve weight DMA bytes
    bf = jax.random.uniform(kb, (1, out_dim), jnp.float32, -bound, bound)
    params["final"] = (wf, bf)
    return params


def adj_decoder_reference(params, z):
    """Pure-JAX reference with the PyTorch (training-mode) math."""
    h = z
    for (w, b, gamma, beta) in params["layers"]:
        y = h @ w + b
        mu_b = jnp.mean(y, axis=0, keepdims=True)
        var_b = jnp.mean((y - mu_b) ** 2, axis=0, keepdims=True)
        y = gamma * (y - mu_b) * jax.lax.rsqrt(var_b + BN_EPS) + beta
        mu_l = jnp.mean(y, axis=-1, keepdims=True)
        var_l = jnp.mean((y - mu_l) ** 2, axis=-1, keepdims=True)
        y = (y - mu_l) * jax.lax.rsqrt(var_l + LN_EPS)
        h = jnp.maximum(y, 0.0)
    wf, bf = params["final"]
    return jax.nn.sigmoid(h @ wf.astype(jnp.float32) + bf)


if __name__ == "__main__":
    # Small shapes consistent with the module: z -> [128, 64] (reversed hidden) -> out.
    batch = 8
    z_dim = 32
    hidden_dim = [64, 128]   # module reverses this to [128, 64]
    out_dim = 1200           # deliberately NOT a multiple of 128 -> ragged last tile

    key = jax.random.PRNGKey(0)
    key, kz = jax.random.split(key)
    z = jax.random.normal(kz, (batch, z_dim), jnp.float32)

    params = init_params(key, z_dim, hidden_dim, out_dim)

    # Cap the column tile at 512 for this tiny demo so it exercises a 3-step
    # grid plus ragged-tail masking; production shapes use the default
    # VMEM-budgeted tile (up to 16384 columns).
    xrec = adj_decoder_forward_jit(params, z, max_tn=512)
    xrec = jax.block_until_ready(xrec)

    assert xrec.shape == (batch, out_dim)
    assert bool(jnp.all(jnp.isfinite(xrec)))

    ref = adj_decoder_reference(params, z)
    assert bool(jnp.allclose(xrec, ref, atol=2e-2)), "mismatch vs pure-JAX reference"

    print("KERNEL_OK")
</pallas_src>

<mosaic_0001>
module attributes {stable_mosaic.version = 11 : i64} {
  func.func @_final_kernel(%arg0: i32, %arg1: memref<8x64xf32, #tpu.memory_space<vmem>>, %arg2: memref<64x512xbf16, #tpu.memory_space<vmem>>, %arg3: memref<1x512xf32, #tpu.memory_space<vmem>>, %arg4: memref<8x512xf32, #tpu.memory_space<vmem>>) attributes {dimension_semantics = [#tpu.dimension_semantics<parallel>], iteration_bounds = array<i64: 3>, scalar_prefetch = 0 : i64, scratch_operands = 0 : i64, tpu.core_type = #tpu.core_type<tc>, window_params = [{pipeline_mode = #tpu.pipeline_mode<synchronous>, transform_indices = @transform_0, window_bounds = array<i64: 8, 64>}, {transform_indices = @transform_1, window_bounds = array<i64: 64, 512>}, {transform_indices = @transform_2, window_bounds = array<i64: 1, 512>}, {transform_indices = @transform_3, window_bounds = array<i64: 8, 512>}]} {
    %c0 = arith.constant 0 : index
    %c0_0 = arith.constant 0 : index
    %0 = vector.load %arg1[%c0, %c0_0] : memref<8x64xf32, #tpu.memory_space<vmem>>, vector<8x64xf32>
    %1 = arith.truncf %0 : vector<8x64xf32> to vector<8x64xbf16>
    %c0_1 = arith.constant 0 : index
    %c0_2 = arith.constant 0 : index
    %2 = vector.load %arg2[%c0_1, %c0_2] : memref<64x512xbf16, #tpu.memory_space<vmem>>, vector<64x512xbf16>
    %cst = arith.constant dense<0.000000e+00> : vector<8x512xf32>
    %3 = tpu.matmul %1, %2, %cst {dimension_numbers = #tpu.dot_dimension_numbers<[1], [0], [0], [1], [0, 0, 1, 1], [], []>} : vector<8x64xbf16>, vector<64x512xbf16>, vector<8x512xf32> -> vector<8x512xf32>
    %c0_3 = arith.constant 0 : index
    %c0_4 = arith.constant 0 : index
    %4 = vector.load %arg3[%c0_3, %c0_4] : memref<1x512xf32, #tpu.memory_space<vmem>>, vector<1x512xf32>
    %5 = vector.broadcast %4 : vector<1x512xf32> to vector<8x512xf32>
    %6 = arith.addf %3, %5 : vector<8x512xf32>
    %7 = arith.negf %6 : vector<8x512xf32>
    %8 = math.exp %7 : vector<8x512xf32>
    %cst_5 = arith.constant 1.000000e+00 : f32
    %9 = vector.broadcast %cst_5 : f32 to vector<8x512xf32>
    %10 = arith.addf %9, %8 : vector<8x512xf32>
    %11 = arith.divf %9, %10 : vector<8x512xf32>
    %c0_6 = arith.constant 0 : index
    %c0_7 = arith.constant 0 : index
    %12 = vector.load %arg4[%c0_6, %c0_7] : memref<8x512xf32, #tpu.memory_space<vmem>>, vector<8x512xf32>
    tpu.vector_store %arg4[%c0_6, %c0_7], %11 {strides = array<i32>} : memref<8x512xf32, #tpu.memory_space<vmem>>, vector<8x512xf32>,
    return
  }
  func.func @transform_0(%arg0: i32) -> (i32, i32) {
    %c0_i32 = arith.constant 0 : i32
    %c0_i32_0 = arith.constant 0 : i32
    %c0_i32_1 = arith.constant 0 : i32
    return %c0_i32, %c0_i32_0 : i32, i32
  }
  func.func @transform_1(%arg0: i32) -> (i32, i32) {
    %c0_i32 = arith.constant 0 : i32
    %c0_i32_0 = arith.constant 0 : i32
    return %c0_i32, %arg0 : i32, i32
  }
  func.func @transform_2(%arg0: i32) -> (i32, i32) {
    %c0_i32 = arith.constant 0 : i32
    %c0_i32_0 = arith.constant 0 : i32
    return %c0_i32, %arg0 : i32, i32
  }
  func.func @transform_3(%arg0: i32) -> (i32, i32) {
    %c0_i32 = arith.constant 0 : i32
    %c0_i32_0 = arith.constant 0 : i32
    return %c0_i32, %arg0 : i32, i32
  }
}

module attributes {stable_mosaic.version = 11 : i64} {
  func.func @kernel(%arg0: i32, %arg1: memref<8x32xf32, #tpu.memory_space<vmem>>, %arg2: memref<32x128xf32, #tpu.memory_space<vmem>>, %arg3: memref<1x128xf32, #tpu.memory_space<vmem>>, %arg4: memref<1x128xf32, #tpu.memory_space<vmem>>, %arg5: memref<1x128xf32, #tpu.memory_space<vmem>>, %arg6: memref<128x64xf32, #tpu.memory_space<vmem>>, %arg7: memref<1x64xf32, #tpu.memory_space<vmem>>, %arg8: memref<1x64xf32, #tpu.memory_space<vmem>>, %arg9: memref<1x64xf32, #tpu.memory_space<vmem>>, %arg10: memref<8x64xf32, #tpu.memory_space<vmem>>) attributes {dimension_semantics = [#tpu.dimension_semantics<arbitrary>], iteration_bounds = array<i64: 1>, scalar_prefetch = 0 : i64, scratch_operands = 0 : i64, tpu.core_type = #tpu.core_type<tc>, window_params = [{pipeline_mode = #tpu.pipeline_mode<synchronous>, transform_indices = @transform_0, window_bounds = array<i64: 8, 32>}, {pipeline_mode = #tpu.pipeline_mode<synchronous>, transform_indices = @transform_1, window_bounds = array<i64: 32, 128>}, {pipeline_mode = #tpu.pipeline_mode<synchronous>, transform_indices = @transform_2, window_bounds = array<i64: 1, 128>}, {pipeline_mode = #tpu.pipeline_mode<synchronous>, transform_indices = @transform_3, window_bounds = array<i64: 1, 128>}, {pipeline_mode = #tpu.pipeline_mode<synchronous>, transform_indices = @transform_4, window_bounds = array<i64: 1, 128>}, {pipeline_mode = #tpu.pipeline_mode<synchronous>, transform_indices = @transform_5, window_bounds = array<i64: 128, 64>}, {pipeline_mode = #tpu.pipeline_mode<synchronous>, transform_indices = @transform_6, window_bounds = array<i64: 1, 64>}, {pipeline_mode = #tpu.pipeline_mode<synchronous>, transform_indices = @transform_7, window_bounds = array<i64: 1, 64>}, {pipeline_mode = #tpu.pipeline_mode<synchronous>, transform_indices = @transform_8, window_bounds = array<i64: 1, 64>}, {pipeline_mode = #tpu.pipeline_mode<synchronous>, transform_indices = @transform_9, window_bounds = array<i64: 8, 64>}]} {
    %c0 = arith.constant 0 : index
    %c0_0 = arith.constant 0 : index
    %0 = vector.load %arg1[%c0, %c0_0] : memref<8x32xf32, #tpu.memory_space<vmem>>, vector<8x32xf32>
    %c0_1 = arith.constant 0 : index
    %c0_2 = arith.constant 0 : index
    %1 = vector.load %arg2[%c0_1, %c0_2] : memref<32x128xf32, #tpu.memory_space<vmem>>, vector<32x128xf32>
    %c0_3 = arith.constant 0 : index
    %c0_4 = arith.constant 0 : index
    %2 = vector.load %arg3[%c0_3, %c0_4] : memref<1x128xf32, #tpu.memory_space<vmem>>, vector<1x128xf32>
    %c0_5 = arith.constant 0 : index
    %c0_6 = arith.constant 0 : index
    %3 = vector.load %arg4[%c0_5, %c0_6] : memref<1x128xf32, #tpu.memory_space<vmem>>, vector<1x128xf32>
    %c0_7 = arith.constant 0 : index
    %c0_8 = arith.constant 0 : index
    %4 = vector.load %arg5[%c0_7, %c0_8] : memref<1x128xf32, #tpu.memory_space<vmem>>, vector<1x128xf32>
    %cst = arith.constant dense<0.000000e+00> : vector<8x128xf32>
    %5 = tpu.matmul %0, %1, %cst {dimension_numbers = #tpu.dot_dimension_numbers<[1], [0], [0], [1], [0, 0, 1, 1], [], []>} : vector<8x32xf32>, vector<32x128xf32>, vector<8x128xf32> -> vector<8x128xf32>
    %6 = vector.broadcast %2 : vector<1x128xf32> to vector<8x128xf32>
    %7 = arith.addf %5, %6 : vector<8x128xf32>
    %cst_9 = arith.constant dense<0.000000e+00> : vector<128xf32>
    %8 = vector.multi_reduction <add>, %7, %cst_9 [0] : vector<8x128xf32> to vector<128xf32>
    %9 = vector.shape_cast %8 : vector<128xf32> to vector<1x128xf32>
    %cst_10 = arith.constant 8.000000e+00 : f32
    %10 = vector.broadcast %cst_10 : f32 to vector<1x128xf32>
    %11 = arith.divf %9, %10 : vector<1x128xf32>
    %12 = vector.broadcast %11 : vector<1x128xf32> to vector<8x128xf32>
    %13 = arith.subf %7, %12 : vector<8x128xf32>
    %14 = arith.mulf %13, %13 : vector<8x128xf32>
    %cst_11 = arith.constant dense<0.000000e+00> : vector<128xf32>
    %15 = vector.multi_reduction <add>, %14, %cst_11 [0] : vector<8x128xf32> to vector<128xf32>
    %16 = vector.shape_cast %15 : vector<128xf32> to vector<1x128xf32>
    %cst_12 = arith.constant 8.000000e+00 : f32
    %17 = vector.broadcast %cst_12 : f32 to vector<1x128xf32>
    %18 = arith.divf %16, %17 : vector<1x128xf32>
    %cst_13 = arith.constant 1.000000e-03 : f32
    %19 = vector.broadcast %cst_13 : f32 to vector<1x128xf32>
    %20 = arith.addf %18, %19 : vector<1x128xf32>
    %21 = math.rsqrt %20 : vector<1x128xf32>
    %22 = arith.mulf %3, %21 : vector<1x128xf32>
    %23 = vector.broadcast %22 : vector<1x128xf32> to vector<8x128xf32>
    %24 = arith.mulf %7, %23 : vector<8x128xf32>
    %25 = arith.mulf %11, %22 : vector<1x128xf32>
    %26 = arith.subf %4, %25 : vector<1x128xf32>
    %27 = vector.broadcast %26 : vector<1x128xf32> to vector<8x128xf32>
    %28 = arith.addf %24, %27 : vector<8x128xf32>
    %cst_14 = arith.constant dense<0.000000e+00> : vector<8xf32>
    %29 = vector.multi_reduction <add>, %28, %cst_14 [1] : vector<8x128xf32> to vector<8xf32>
    %30 = vector.shape_cast %29 : vector<8xf32> to vector<8x1xf32>
    %cst_15 = arith.constant 1.280000e+02 : f32
    %31 = vector.broadcast %cst_15 : f32 to vector<8x1xf32>
    %32 = arith.divf %30, %31 : vector<8x1xf32>
    %33 = vector.broadcast %32 : vector<8x1xf32> to vector<8x128xf32>
    %34 = arith.subf %28, %33 : vector<8x128xf32>
    %35 = arith.mulf %34, %34 : vector<8x128xf32>
    %cst_16 = arith.constant dense<0.000000e+00> : vector<8xf32>
    %36 = vector.multi_reduction <add>, %35, %cst_16 [1] : vector<8x128xf32> to vector<8xf32>
    %37 = vector.shape_cast %36 : vector<8xf32> to vector<8x1xf32>
    %cst_17 = arith.constant 1.280000e+02 : f32
    %38 = vector.broadcast %cst_17 : f32 to vector<8x1xf32>
    %39 = arith.divf %37, %38 : vector<8x1xf32>
    %40 = vector.broadcast %32 : vector<8x1xf32> to vector<8x128xf32>
    %41 = arith.subf %28, %40 : vector<8x128xf32>
    %cst_18 = arith.constant 9.99999974E-6 : f32
    %42 = vector.broadcast %cst_18 : f32 to vector<8x1xf32>
    %43 = arith.addf %39, %42 : vector<8x1xf32>
    %44 = math.rsqrt %43 : vector<8x1xf32>
    %45 = vector.broadcast %44 : vector<8x1xf32> to vector<8x128xf32>
    %46 = arith.mulf %41, %45 : vector<8x128xf32>
    %cst_19 = arith.constant 0.000000e+00 : f32
    %47 = vector.broadcast %cst_19 : f32 to vector<8x128xf32>
    %48 = arith.maximumf %46, %47 : vector<8x128xf32>
    %c0_20 = arith.constant 0 : index
    %c0_21 = arith.constant 0 : index
    %49 = vector.load %arg6[%c0_20, %c0_21] : memref<128x64xf32, #tpu.memory_space<vmem>>, vector<128x64xf32>
    %c0_22 = arith.constant 0 : index
    %c0_23 = arith.constant 0 : index
    %50 = vector.load %arg7[%c0_22, %c0_23] : memref<1x64xf32, #tpu.memory_space<vmem>>, vector<1x64xf32>
    %c0_24 = arith.constant 0 : index
    %c0_25 = arith.constant 0 : index
    %51 = vector.load %arg8[%c0_24, %c0_25] : memref<1x64xf32, #tpu.memory_space<vmem>>, vector<1x64xf32>
    %c0_26 = arith.constant 0 : index
    %c0_27 = arith.constant 0 : index
    %52 = vector.load %arg9[%c0_26, %c0_27] : memref<1x64xf32, #tpu.memory_space<vmem>>, vector<1x64xf32>
    %cst_28 = arith.constant dense<0.000000e+00> : vector<8x64xf32>
    %53 = tpu.matmul %48, %49, %cst_28 {dimension_numbers = #tpu.dot_dimension_numbers<[1], [0], [0], [1], [0, 0, 1, 1], [], []>} : vector<8x128xf32>, vector<128x64xf32>, vector<8x64xf32> -> vector<8x64xf32>
    %54 = vector.broadcast %50 : vector<1x64xf32> to vector<8x64xf32>
    %55 = arith.addf %53, %54 : vector<8x64xf32>
    %cst_29 = arith.constant dense<0.000000e+00> : vector<64xf32>
    %56 = vector.multi_reduction <add>, %55, %cst_29 [0] : vector<8x64xf32> to vector<64xf32>
    %57 = vector.shape_cast %56 : vector<64xf32> to vector<1x64xf32>
    %cst_30 = arith.constant 8.000000e+00 : f32
    %58 = vector.broadcast %cst_30 : f32 to vector<1x64xf32>
    %59 = arith.divf %57, %58 : vector<1x64xf32>
    %60 = vector.broadcast %59 : vector<1x64xf32> to vector<8x64xf32>
    %61 = arith.subf %55, %60 : vector<8x64xf32>
    %62 = arith.mulf %61, %61 : vector<8x64xf32>
    %cst_31 = arith.constant dense<0.000000e+00> : vector<64xf32>
    %63 = vector.multi_reduction <add>, %62, %cst_31 [0] : vector<8x64xf32> to vector<64xf32>
    %64 = vector.shape_cast %63 : vector<64xf32> to vector<1x64xf32>
    %cst_32 = arith.constant 8.000000e+00 : f32
    %65 = vector.broadcast %cst_32 : f32 to vector<1x64xf32>
    %66 = arith.divf %64, %65 : vector<1x64xf32>
    %cst_33 = arith.constant 1.000000e-03 : f32
    %67 = vector.broadcast %cst_33 : f32 to vector<1x64xf32>
    %68 = arith.addf %66, %67 : vector<1x64xf32>
    %69 = math.rsqrt %68 : vector<1x64xf32>
    %70 = arith.mulf %51, %69 : vector<1x64xf32>
    %71 = vector.broadcast %70 : vector<1x64xf32> to vector<8x64xf32>
    %72 = arith.mulf %55, %71 : vector<8x64xf32>
    %73 = arith.mulf %59, %70 : vector<1x64xf32>
    %74 = arith.subf %52, %73 : vector<1x64xf32>
    %75 = vector.broadcast %74 : vector<1x64xf32> to vector<8x64xf32>
    %76 = arith.addf %72, %75 : vector<8x64xf32>
    %cst_34 = arith.constant dense<0.000000e+00> : vector<8xf32>
    %77 = vector.multi_reduction <add>, %76, %cst_34 [1] : vector<8x64xf32> to vector<8xf32>
    %78 = vector.shape_cast %77 : vector<8xf32> to vector<8x1xf32>
    %cst_35 = arith.constant 6.400000e+01 : f32
    %79 = vector.broadcast %cst_35 : f32 to vector<8x1xf32>
    %80 = arith.divf %78, %79 : vector<8x1xf32>
    %81 = vector.broadcast %80 : vector<8x1xf32> to vector<8x64xf32>
    %82 = arith.subf %76, %81 : vector<8x64xf32>
    %83 = arith.mulf %82, %82 : vector<8x64xf32>
    %cst_36 = arith.constant dense<0.000000e+00> : vector<8xf32>
    %84 = vector.multi_reduction <add>, %83, %cst_36 [1] : vector<8x64xf32> to vector<8xf32>
    %85 = vector.shape_cast %84 : vector<8xf32> to vector<8x1xf32>
    %cst_37 = arith.constant 6.400000e+01 : f32
    %86 = vector.broadcast %cst_37 : f32 to vector<8x1xf32>
    %87 = arith.divf %85, %86 : vector<8x1xf32>
    %88 = vector.broadcast %80 : vector<8x1xf32> to vector<8x64xf32>
    %89 = arith.subf %76, %88 : vector<8x64xf32>
    %cst_38 = arith.constant 9.99999974E-6 : f32
    %90 = vector.broadcast %cst_38 : f32 to vector<8x1xf32>
    %91 = arith.addf %87, %90 : vector<8x1xf32>
    %92 = math.rsqrt %91 : vector<8x1xf32>
    %93 = vector.broadcast %92 : vector<8x1xf32> to vector<8x64xf32>
    %94 = arith.mulf %89, %93 : vector<8x64xf32>
    %cst_39 = arith.constant 0.000000e+00 : f32
    %95 = vector.broadcast %cst_39 : f32 to vector<8x64xf32>
    %96 = arith.maximumf %94, %95 : vector<8x64xf32>
    %c0_40 = arith.constant 0 : index
    %c0_41 = arith.constant 0 : index
    %97 = vector.load %arg10[%c0_40, %c0_41] : memref<8x64xf32, #tpu.memory_space<vmem>>, vector<8x64xf32>
    tpu.vector_store %arg10[%c0_40, %c0_41], %96 {strides = array<i32>} : memref<8x64xf32, #tpu.memory_space<vmem>>, vector<8x64xf32>,
    return
  }
  func.func @transform_0(%arg0: i32) -> (i32, i32) {
    %c0_i32 = arith.constant 0 : i32
    %c0_i32_0 = arith.constant 0 : i32
    %c0_i32_1 = arith.constant 0 : i32
    return %c0_i32, %c0_i32_0 : i32, i32
  }
  func.func @transform_1(%arg0: i32) -> (i32, i32) {
    %c0_i32 = arith.constant 0 : i32
    %c0_i32_0 = arith.constant 0 : i32
    %c0_i32_1 = arith.constant 0 : i32
    return %c0_i32, %c0_i32_0 : i32, i32
  }
  func.func @transform_2(%arg0: i32) -> (i32, i32) {
    %c0_i32 = arith.constant 0 : i32
    %c0_i32_0 = arith.constant 0 : i32
    %c0_i32_1 = arith.constant 0 : i32
    return %c0_i32, %c0_i32_0 : i32, i32
  }
  func.func @transform_3(%arg0: i32) -> (i32, i32) {
    %c0_i32 = arith.constant 0 : i32
    %c0_i32_0 = arith.constant 0 : i32
    %c0_i32_1 = arith.constant 0 : i32
    return %c0_i32, %c0_i32_0 : i32, i32
  }
  func.func @transform_4(%arg0: i32) -> (i32, i32) {
    %c0_i32 = arith.constant 0 : i32
    %c0_i32_0 = arith.constant 0 : i32
    %c0_i32_1 = arith.constant 0 : i32
    return %c0_i32, %c0_i32_0 : i32, i32
  }
  func.func @transform_5(%arg0: i32) -> (i32, i32) {
    %c0_i32 = arith.constant 0 : i32
    %c0_i32_0 = arith.constant 0 : i32
    %c0_i32_1 = arith.constant 0 : i32
    return %c0_i32, %c0_i32_0 : i32, i32
  }
  func.func @transform_6(%arg0: i32) -> (i32, i32) {
    %c0_i32 = arith.constant 0 : i32
    %c0_i32_0 = arith.constant 0 : i32
    %c0_i32_1 = arith.constant 0 : i32
    return %c0_i32, %c0_i32_0 : i32, i32
  }
  func.func @transform_7(%arg0: i32) -> (i32, i32) {
    %c0_i32 = arith.constant 0 : i32
    %c0_i32_0 = arith.constant 0 : i32
    %c0_i32_1 = arith.constant 0 : i32
    return %c0_i32, %c0_i32_0 : i32, i32
  }
  func.func @transform_8(%arg0: i32) -> (i32, i32) {
    %c0_i32 = arith.constant 0 : i32
    %c0_i32_0 = arith.constant 0 : i32
    %c0_i32_1 = arith.constant 0 : i32
    return %c0_i32, %c0_i32_0 : i32, i32
  }
  func.func @transform_9(%arg0: i32) -> (i32, i32) {
    %c0_i32 = arith.constant 0 : i32
    %c0_i32_0 = arith.constant 0 : i32
    %c0_i32_1 = arith.constant 0 : i32
    return %c0_i32, %c0_i32_0 : i32, i32
  }
}

</mosaic_0001>

<llo_original>
// kernel: adj_decoder_forward.3
$region0: #{adj_decoder_forward.3}
  #allocation0 [shape = 'u32[]', space=smem, size = 0x4, offset = 0x4, fixed_abs, tag = 'smem constant byte address 0x4 - core index']
  #allocation1 [shape = 'u32[144,128]{1,0:T(1,128)}', space=vmem, size = 0x12000, scoped, tag = 'internal scratch']
  %s0 = inlined_call_operand.vmem [shape: f32[8,64], index: 0, kind: input, shape index: {}]
  %s1 = inlined_call_operand.vmem [shape: bf16[64,1200], index: 1, kind: input, shape index: {}]
  %s2 = inlined_call_operand.vmem [shape: f32[1,1200], index: 2, kind: input, shape index: {}]
  %s3 = inlined_call_operand.hbm [shape: f32[8,1200], index: 3, kind: output, shape index: {}]
  %s4 = sld [smem:[#allocation0]]
  $region111: #{adj_decoder_forward.3} parent=0
    _
  %s6 = ssub.s32 1, %s4
  %s7 = scalar_select 0, %s6, %s4
  $region1: #{adj_decoder_forward.3} parent=0
    #allocation2 [shape = 'u8[131072]{0}', space=vmem, size = 0x20000, scoped, tag = 'input window, operand 1']
    #allocation3 [shape = 'u8[32768]{0}', space=vmem, size = 0x8000, scoped, tag = 'output window, operand 0']
    #allocation4 [shape = 's32[2]{0}', space=sflag, size = 0x8, scoped, tag = 'scoped memory for adj_decoder_forward.3']
    %8 = vsyncpa [#allocation4], 0
    %s9 = scalar_lea.sflag [#allocation4], 1
    %10 = vsyncpa %s9, 0
    loop: start=0, step=1, limit=5
    $region2: #{adj_decoder_forward.3} parent=1 // loop_pre_header
      _
    $region3: #{adj_decoder_forward.3} parent=1 // loop_header
      %s12 = sphi 0, %s16
      %p13 = scmp.ge.s32.totalorder %s12, 5
      %s20 = sphi 0, %s20
      %s22 = sphi 0, %s20
      %s23 = sphi 0, %s22
      %s37 = sphi 0, %s23
      %s43 = sphi 0, %s45
      %s46 = sphi 0, %s43
      %s47 = sphi 0, %s46
      %s63 = sphi 0, %s47
      %s69 = sphi 0, %s71
      %s72 = sphi 0, %s69
      %s73 = sphi 0, %s72
      %s89 = sphi 0, %s73
      %s95 = sphi 0, %s97
      %s98 = sphi 0, %s95
      %s99 = sphi 0, %s98
      %s115 = sphi 0, %s99
    $region4: #{adj_decoder_forward.3} parent=1 // loop_header_branch
      %15 = sbr.rel (%p13) target = $region8
    $region5: #{adj_decoder_forward.3} parent=1 // loop_body
      %s17 = ssub.s32 %s12, 1
      %s18 = ssub.s32 %s12, 2
      %s19 = sadd.s32 %s12, 1
      %s21 = sadd.s32 %s20, 1
      %p24 = scmp.eq.s32.totalorder %s12, 2
      %p25 = scmp.ne.s32.totalorder %s20, %s22
      %p26 = scmp.eq.s32.totalorder %s12, 0
      %p27 = por %p25, %p26
      %p28 = scmp.ne.s32.totalorder %s20, %s22
      %p29 = scmp.eq.s32.totalorder %s17, 2
      %p30 = por %p28, %p29
      %p31 = scmp.ne.s32.totalorder %s22, %s23
      %p32 = scmp.eq.s32.totalorder %s17, 0
      %p33 = por %p31, %p32
      %p34 = scmp.ne.s32.totalorder %s22, %s23
      %p35 = scmp.eq.s32.totalorder %s18, 2
      %p36 = por %p34, %p35
      %p38 = scmp.ne.s32.totalorder %s23, %s37
      %p39 = scmp.eq.s32.totalorder %s18, 0
      %p40 = por %p38, %p39
      %s41 = ssub.s32 %s12, %s19
      %p42 = scmp.eq.s32.totalorder %s41, 0
      %s44 = sadd.s32 %s43, 1
      %s45 = scalar_select %p42, %s43, %s44
      %p48 = pneg %p42
      %p49 = scmp.eq.s32.totalorder %s12, 2
      %p50 = por %p48, %p49
      %p51 = scmp.ne.s32.totalorder %s43, %s46
      %p52 = scmp.eq.s32.totalorder %s12, 0
      %p53 = por %p51, %p52
      %p54 = scmp.ne.s32.totalorder %s43, %s46
      %p55 = scmp.eq.s32.totalorder %s17, 2
      %p56 = por %p54, %p55
      %p57 = scmp.ne.s32.totalorder %s46, %s47
      %p58 = scmp.eq.s32.totalorder %s17, 0
      %p59 = por %p57, %p58
      %p60 = scmp.ne.s32.totalorder %s46, %s47
      %p61 = scmp.eq.s32.totalorder %s18, 2
      %p62 = por %p60, %p61
      %p64 = scmp.ne.s32.totalorder %s47, %s63
      %p65 = scmp.eq.s32.totalorder %s18, 0
      %p66 = por %p64, %p65
      %s67 = ssub.s32 %s12, %s19
      %p68 = scmp.eq.s32.totalorder %s67, 0
      %s70 = sadd.s32 %s69, 1
      %s71 = scalar_select %p68, %s69, %s70
      %p74 = pneg %p68
      %p75 = scmp.eq.s32.totalorder %s12, 2
      %p76 = por %p74, %p75
      %p77 = scmp.ne.s32.totalorder %s69, %s72
      %p78 = scmp.eq.s32.totalorder %s12, 0
      %p79 = por %p77, %p78
      %p80 = scmp.ne.s32.totalorder %s69, %s72
      %p81 = scmp.eq.s32.totalorder %s17, 2
      %p82 = por %p80, %p81
      %p83 = scmp.ne.s32.totalorder %s72, %s73
      %p84 = scmp.eq.s32.totalorder %s17, 0
      %p85 = por %p83, %p84
      %p86 = scmp.ne.s32.totalorder %s72, %s73
      %p87 = scmp.eq.s32.totalorder %s18, 2
      %p88 = por %p86, %p87
      %p90 = scmp.ne.s32.totalorder %s73, %s89
      %p91 = scmp.eq.s32.totalorder %s18, 0
      %p92 = por %p90, %p91
      %s93 = ssub.s32 %s12, %s19
      %p94 = scmp.eq.s32.totalorder %s93, 0
      %s96 = sadd.s32 %s95, 1
      %s97 = scalar_select %p94, %s95, %s96
      %p100 = pneg %p94
      %p101 = scmp.eq.s32.totalorder %s12, 2
      %p102 = por %p100, %p101
      %p103 = scmp.ne.s32.totalorder %s95, %s98
      %p104 = scmp.eq.s32.totalorder %s12, 0
      %p105 = por %p103, %p104
      %p106 = scmp.ne.s32.totalorder %s95, %s98
      %p107 = scmp.eq.s32.totalorder %s17, 2
      %p108 = por %p106, %p107
      %p109 = scmp.ne.s32.totalorder %s98, %s99
      %p110 = scmp.eq.s32.totalorder %s17, 0
      %p111 = por %p109, %p110
      %p112 = scmp.ne.s32.totalorder %s98, %s99
      %p113 = scmp.eq.s32.totalorder %s18, 2
      %p114 = por %p112, %p113
      %p116 = scmp.ne.s32.totalorder %s99, %s115
      %p117 = scmp.eq.s32.totalorder %s18, 0
      %p118 = por %p116, %p117
      %p119 = scmp.le.s32.totalorder 1, %s12
      %p120 = scmp.lt.s32.totalorder %s12, 4
      %p121 = pnand %p119, %p120
      %p122 = pneg %p121
      // Predicated region
      $region9: #{adj_decoder_forward.3} parent=5 // pred_check
        _
      $region10: #{adj_decoder_forward.3} parent=5 // pred_check_branch
        %124 = sbr.rel (%p121) target = $region12
      $region11: #{adj_decoder_forward.3} parent=5 // pred_region
        %s125 = ssub.s32 %s12, 1
        // Predicated region
        $region13: #{adj_decoder_forward.3} parent=11 // pred_check
          %p126 = pneg %p33
        $region14: #{adj_decoder_forward.3} parent=11 // pred_check_branch
          %128 = sbr.rel (%p126) target = $region16
        $region15: #{adj_decoder_forward.3} parent=11 // pred_region
          _
        $region16: #{adj_decoder_forward.3} parent=11 // pred_fallthru
          _
      $region12: #{adj_decoder_forward.3} parent=5 // pred_fallthru
        _
      %p129 = scmp.lt.s32.totalorder %s12, 3
      // Predicated region
      $region17: #{adj_decoder_forward.3} parent=5 // pred_check
        %p130 = pneg %p129
      $region18: #{adj_decoder_forward.3} parent=5 // pred_check_branch
        %132 = sbr.rel (%p130) target = $region20
      $region19: #{adj_decoder_forward.3} parent=5 // pred_region
        // Predicated region
        $region21: #{adj_decoder_forward.3} parent=19 // pred_check
          %p133 = pneg %p53
        $region22: #{adj_decoder_forward.3} parent=19 // pred_check_branch
          %135 = sbr.rel (%p133) target = $region24
        $region23: #{adj_decoder_forward.3} parent=19 // pred_region
          %s136 = sand.u32 %s43, 1
          %s137 = sand.u32 %s43, 1
          %s138 = smul.addr %s137, 128
          %s139 = scalar_lea.vmem [#allocation2], %s138
          %s140 = smul.u32 4, %s12
          %s141 = ssub.s32 10, %s140
          %p142 = scmp.lt.s32.totalorder %s141, 4
          %s143 = scalar_select %p142, %s141, 4
          %s144 = smul.u32 512, %s143
          %p145 = scmp.ne.s32.totalorder 0, %s144
          %s146 = smul.addr %s140, 4
          %s147 = scalar_lea.vmem %s1, %s146
          %s148 = smul.u32 %s143, 4
          // Predicated region
          $region25: #{adj_decoder_forward.3} parent=23 // pred_check
            %p149 = pneg %p145
          $region26: #{adj_decoder_forward.3} parent=23 // pred_check_branch
            %151 = sbr.rel (%p149) target = $region28
          $region27: #{adj_decoder_forward.3} parent=23 // pred_region
            %p152 = scmp.lt.u32.totalorder %s148, 8
            %p153 = pneg %p152
            // Predicated region
            $region29: #{adj_decoder_forward.3} parent=27 // pred_check
              _
            $region30: #{adj_decoder_forward.3} parent=27 // pred_check_branch
              %155 = sbr.rel (%p152) target = $region32
            $region31: #{adj_decoder_forward.3} parent=27 // pred_region
              %s184 = sand.u32 %s148, 7
              %p185 = scmp.eq.s32.totalorder %s184, 0
              // Predicated region
              $region44: #{adj_decoder_forward.3} parent=31 // pred_check
                %p186 = pneg %p185
              $region45: #{adj_decoder_forward.3} parent=31 // pred_check_branch
                %188 = sbr.rel (%p186) target = $region47
              $region46: #{adj_decoder_forward.3} parent=31 // pred_region
                %s189 = sshrl.u32 %s148, 3
                %s190 = sshrl.u32 %s189, 3
                // While loop
                $region48: #{adj_decoder_forward.3} parent=46 // loop_pre_header
                  _
                $region49: #{adj_decoder_forward.3} parent=46 // loop_header
                  %s194 = sphi 0, %s196
                  %p195 = scmp.ge.s32.totalorder %s194, %s190
                  %s199 = sphi 0, %s332
                  %s200 = sphi %s147, %s335
                  %s201 = sphi %s139, %s336
                $region50: #{adj_decoder_forward.3} parent=46 // loop_header_branch
                  %198 = sbr.rel (%p195) target = $region54
                $region51: #{adj_decoder_forward.3} parent=46 // loop_body
                  %v202 = vld [vmem:[%s200] sm:$0xff]
                  %203 = vst [vmem:[%s201] sm:$0xff] %v202
                  %v204 = vld [vmem:[%s200 + $0x8] sm:$0xff]
                  %205 = vst [vmem:[%s201 + $0x8] sm:$0xff] %v204
                  %v206 = vld [vmem:[%s200 + $0x10] sm:$0xff]
                  %207 = vst [vmem:[%s201 + $0x10] sm:$0xff] %v206
                  %v208 = vld [vmem:[%s200 + $0x18] sm:$0xff]
                  %209 = vst [vmem:[%s201 + $0x18] sm:$0xff] %v208
                  %v210 = vld [vmem:[%s200 + $0x20] sm:$0xff]
                  %211 = vst [vmem:[%s201 + $0x20] sm:$0xff] %v210
                  %v212 = vld [vmem:[%s200 + $0x28] sm:$0xff]
                  %213 = vst [vmem:[%s201 + $0x28] sm:$0xff] %v212
                  %v214 = vld [vmem:[%s200 + $0x30] sm:$0xff]
                  %215 = vst [vmem:[%s201 + $0x30] sm:$0xff] %v214
                  %v216 = vld [vmem:[%s200 + $0x38] sm:$0xff]
                  %217 = vst [vmem:[%s201 + $0x38] sm:$0xff] %v216
                  %v218 = vld [vmem:[%s200 + $0x28] sm:$0xff]
                  %219 = vst [vmem:[%s201 + $0x10] sm:$0xff] %v218
                  %v220 = vld [vmem:[%s200 + $0x30] sm:$0xff]
                  %221 = vst [vmem:[%s201 + $0x18] sm:$0xff] %v220
                  %v222 = vld [vmem:[%s200 + $0x38] sm:$0xff]
                  %223 = vst [vmem:[%s201 + $0x20] sm:$0xff] %v222
                  %v224 = vld [vmem:[%s200 + $0x40] sm:$0xff]
                  %225 = vst [vmem:[%s201 + $0x28] sm:$0xff] %v224
                  %v226 = vld [vmem:[%s200 + $0x48] sm:$0xff]
                  %227 = vst [vmem:[%s201 + $0x30] sm:$0xff] %v226
                  %v228 = vld [vmem:[%s200 + $0x50] sm:$0xff]
                  %229 = vst [vmem:[%s201 + $0x38] sm:$0xff] %v228
                  %v230 = vld [vmem:[%s200 + $0x58] sm:$0xff]
                  %231 = vst [vmem:[%s201 + $0x40] sm:$0xff] %v230
                  %v232 = vld [vmem:[%s200 + $0x60] sm:$0xff]
                  %233 = vst [vmem:[%s201 + $0x48] sm:$0xff] %v232
                  %v234 = vld [vmem:[%s200 + $0x50] sm:$0xff]
                  %235 = vst [vmem:[%s201 + $0x20] sm:$0xff] %v234
                  %v236 = vld [vmem:[%s200 + $0x58] sm:$0xff]
                  %237 = vst [vmem:[%s201 + $0x28] sm:$0xff] %v236
                  %v238 = vld [vmem:[%s200 + $0x60] sm:$0xff]
                  %239 = vst [vmem:[%s201 + $0x30] sm:$0xff] %v238
                  %v240 = vld [vmem:[%s200 + $0x68] sm:$0xff]
                  %241 = vst [vmem:[%s201 + $0x38] sm:$0xff] %v240
                  %v242 = vld [vmem:[%s200 + $0x70] sm:$0xff]
                  %243 = vst [vmem:[%s201 + $0x40] sm:$0xff] %v242
                  %v244 = vld [vmem:[%s200 + $0x78] sm:$0xff]
                  %245 = vst [vmem:[%s201 + $0x48] sm:$0xff] %v244
                  %v246 = vld [vmem:[%s200 + $0x80] sm:$0xff]
                  %247 = vst [vmem:[%s201 + $0x50] sm:$0xff] %v246
                  %v248 = vld [vmem:[%s200 + $0x88] sm:$0xff]
                  %249 = vst [vmem:[%s201 + $0x58] sm:$0xff] %v248
                  %v250 = vld [vmem:[%s200 + $0x78] sm:$0xff]
                  %251 = vst [vmem:[%s201 + $0x30] sm:$0xff] %v250
                  %v252 = vld [vmem:[%s200 + $0x80] sm:$0xff]
                  %253 = vst [vmem:[%s201 + $0x38] sm:$0xff] %v252
                  %v254 = vld [vmem:[%s200 + $0x88] sm:$0xff]
                  %255 = vst [vmem:[%s201 + $0x40] sm:$0xff] %v254
                  %v256 = vld [vmem:[%s200 + $0x90] sm:$0xff]
                  %257 = vst [vmem:[%s201 + $0x48] sm:$0xff] %v256
                  %v258 = vld [vmem:[%s200 + $0x98] sm:$0xff]
                  %259 = vst [vmem:[%s201 + $0x50] sm:$0xff] %v258
                  %v260 = vld [vmem:[%s200 + $0xa0] sm:$0xff]
                  %261 = vst [vmem:[%s201 + $0x58] sm:$0xff] %v260
                  %v262 = vld [vmem:[%s200 + $0xa8] sm:$0xff]
                  %263 = vst [vmem:[%s201 + $0x60] sm:$0xff] %v262
                  %v264 = vld [vmem:[%s200 + $0xb0] sm:$0xff]
                  %265 = vst [vmem:[%s201 + $0x68] sm:$0xff] %v264
                  %v266 = vld [vmem:[%s200 + $0xa0] sm:$0xff]
                  %267 = vst [vmem:[%s201 + $0x40] sm:$0xff] %v266
                  %v268 = vld [vmem:[%s200 + $0xa8] sm:$0xff]
                  %269 = vst [vmem:[%s201 + $0x48] sm:$0xff] %v268
                  %v270 = vld [vmem:[%s200 + $0xb0] sm:$0xff]
                  %271 = vst [vmem:[%s201 + $0x50] sm:$0xff] %v270
                  %v272 = vld [vmem:[%s200 + $0xb8] sm:$0xff]
                  %273 = vst [vmem:[%s201 + $0x58] sm:$0xff] %v272
                  %v274 = vld [vmem:[%s200 + $0xc0] sm:$0xff]
                  %275 = vst [vmem:[%s201 + $0x60] sm:$0xff] %v274
                  %v276 = vld [vmem:[%s200 + $0xc8] sm:$0xff]
                  %277 = vst [vmem:[%s201 + $0x68] sm:$0xff] %v276
                  %v278 = vld [vmem:[%s200 + $0xd0] sm:$0xff]
                  %279 = vst [vmem:[%s201 + $0x70] sm:$0xff] %v278
                  %v280 = vld [vmem:[%s200 + $0xd8] sm:$0xff]
                  %281 = vst [vmem:[%s201 + $0x78] sm:$0xff] %v280
                  %v282 = vld [vmem:[%s200 + $0xc8] sm:$0xff]
                  %283 = vst [vmem:[%s201 + $0x50] sm:$0xff] %v282
                  %v284 = vld [vmem:[%s200 + $0xd0] sm:$0xff]
                  %285 = vst [vmem:[%s201 + $0x58] sm:$0xff] %v284
                  %v286 = vld [vmem:[%s200 + $0xd8] sm:$0xff]
                  %287 = vst [vmem:[%s201 + $0x60] sm:$0xff] %v286
                  %v288 = vld [vmem:[%s200 + $0xe0] sm:$0xff]
                  %289 = vst [vmem:[%s201 + $0x68] sm:$0xff] %v288
                  %v290 = vld [vmem:[%s200 + $0xe8] sm:$0xff]
                  %291 = vst [vmem:[%s201 + $0x70] sm:$0xff] %v290
                  %v292 = vld [vmem:[%s200 + $0xf0] sm:$0xff]
                  %293 = vst [vmem:[%s201 + $0x78] sm:$0xff] %v292
                  %v294 = vld [vmem:[%s200 + $0xf8] sm:$0xff]
                  %295 = vst [vmem:[%s201 + $0x80] sm:$0xff] %v294
                  %v296 = vld [vmem:[%s200 + $0x100] sm:$0xff]
                  %297 = vst [vmem:[%s201 + $0x88] sm:$0xff] %v296
                  %v298 = vld [vmem:[%s200 + $0xf0] sm:$0xff]
                  %299 = vst [vmem:[%s201 + $0x60] sm:$0xff] %v298
                  %v300 = vld [vmem:[%s200 + $0xf8] sm:$0xff]
                  %301 = vst [vmem:[%s201 + $0x68] sm:$0xff] %v300
                  %v302 = vld [vmem:[%s200 + $0x100] sm:$0xff]
                  %303 = vst [vmem:[%s201 + $0x70] sm:$0xff] %v302
                  %v304 = vld [vmem:[%s200 + $0x108] sm:$0xff]
                  %305 = vst [vmem:[%s201 + $0x78] sm:$0xff] %v304
                  %v306 = vld [vmem:[%s200 + $0x110] sm:$0xff]
                  %307 = vst [vmem:[%s201 + $0x80] sm:$0xff] %v306
                  %v308 = vld [vmem:[%s200 + $0x118] sm:$0xff]
                  %309 = vst [vmem:[%s201 + $0x88] sm:$0xff] %v308
                  %v310 = vld [vmem:[%s200 + $0x120] sm:$0xff]
                  %311 = vst [vmem:[%s201 + $0x90] sm:$0xff] %v310
                  %v312 = vld [vmem:[%s200 + $0x128] sm:$0xff]
                  %313 = vst [vmem:[%s201 + $0x98] sm:$0xff] %v312
                  %v314 = vld [vmem:[%s200 + $0x118] sm:$0xff]
                  %315 = vst [vmem:[%s201 + $0x70] sm:$0xff] %v314
                  %v316 = vld [vmem:[%s200 + $0x120] sm:$0xff]
                  %317 = vst [vmem:[%s201 + $0x78] sm:$0xff] %v316
                  %v318 = vld [vmem:[%s200 + $0x128] sm:$0xff]
                  %319 = vst [vmem:[%s201 + $0x80] sm:$0xff] %v318
                  %v320 = vld [vmem:[%s200 + $0x130] sm:$0xff]
                  %321 = vst [vmem:[%s201 + $0x88] sm:$0xff] %v320
                  %v322 = vld [vmem:[%s200 + $0x138] sm:$0xff]
                  %323 = vst [vmem:[%s201 + $0x90] sm:$0xff] %v322
                  %v324 = vld [vmem:[%s200 + $0x140] sm:$0xff]
                  %325 = vst [vmem:[%s201 + $0x98] sm:$0xff] %v324
                  %v326 = vld [vmem:[%s200 + $0x148] sm:$0xff]
                  %327 = vst [vmem:[%s201 + $0xa0] sm:$0xff] %v326
                  %v328 = vld [vmem:[%s200 + $0x150] sm:$0xff]
                  %329 = vst [vmem:[%s201 + $0xa8] sm:$0xff] %v328
                  %s330 = sadd.s32 1, %s199
                  %p331 = scmp.ge.s32.totalorder %s330, %s190
                  %s332 = scalar_select %p331, 0, %s330
                  %s333 = smul.u32 %s332, 64
                  %s334 = smul.u32 %s332, 64
                  %s335 = scalar_lea.vmem %s147, %s333
                  %s336 = scalar_lea.vmem %s139, %s334 [#allocation2]
                $region52: #{adj_decoder_forward.3} parent=46 // loop_footer
                  %s196 = sadd.s32 %s194, 1
                $region53: #{adj_decoder_forward.3} parent=46 // loop_footer_branch
                  %193 = sbr.rel target = $region49
                $region54: #{adj_decoder_forward.3} parent=46 // loop_exit
                  _
                %s337 = sshrl.u32 %s189, 3
                %s338 = sand.u32 %s189, 7
                %s339 = smul.u32 %s337, 8
                %s340 = smul.u32 128, %s339
                %s341 = sshra.s32 %s340, 4
                %s342 = scalar_lea.vmem %s147, %s341
                %s343 = smul.u32 128, %s339
                %s344 = sshra.s32 %s343, 4
                %s345 = scalar_lea.vmem %s139, %s344 [#allocation2]
                // While loop
                $region55: #{adj_decoder_forward.3} parent=46 // loop_pre_header
                  _
                $region56: #{adj_decoder_forward.3} parent=46 // loop_header
                  %s349 = sphi 0, %s351
                  %p350 = scmp.ge.s32.totalorder %s349, %s338
                  %s354 = sphi 0, %s375
                  %s355 = sphi %s342, %s378
                  %s356 = sphi %s345, %s379
                $region57: #{adj_decoder_forward.3} parent=46 // loop_header_branch
                  %353 = sbr.rel (%p350) target = $region61
                $region58: #{adj_decoder_forward.3} parent=46 // loop_body
                  %v357 = vld [vmem:[%s355] sm:$0xff]
                  %358 = vst [vmem:[%s356] sm:$0xff] %v357
                  %v359 = vld [vmem:[%s355 + $0x28] sm:$0xff]
                  %360 = vst [vmem:[%s356 + $0x10] sm:$0xff] %v359
                  %v361 = vld [vmem:[%s355 + $0x50] sm:$0xff]
                  %362 = vst [vmem:[%s356 + $0x20] sm:$0xff] %v361
                  %v363 = vld [vmem:[%s355 + $0x78] sm:$0xff]
                  %364 = vst [vmem:[%s356 + $0x30] sm:$0xff] %v363
                  %v365 = vld [vmem:[%s355 + $0xa0] sm:$0xff]
                  %366 = vst [vmem:[%s356 + $0x40] sm:$0xff] %v365
                  %v367 = vld [vmem:[%s355 + $0xc8] sm:$0xff]
                  %368 = vst [vmem:[%s356 + $0x50] sm:$0xff] %v367
                  %v369 = vld [vmem:[%s355 + $0xf0] sm:$0xff]
                  %370 = vst [vmem:[%s356 + $0x60] sm:$0xff] %v369
                  %v371 = vld [vmem:[%s355 + $0x118] sm:$0xff]
                  %372 = vst [vmem:[%s356 + $0x70] sm:$0xff] %v371
                  %s373 = sadd.s32 1, %s354
                  %p374 = scmp.ge.s32.totalorder %s373, %s338
                  %s375 = scalar_select %p374, 0, %s373
                  %s376 = smul.u32 %s375, 8
                  %s377 = smul.u32 %s375, 8
                  %s378 = scalar_lea.vmem %s342, %s376
                  %s379 = scalar_lea.vmem %s345, %s377 [#allocation2]
                $region59: #{adj_decoder_forward.3} parent=46 // loop_footer
                  %s351 = sadd.s32 %s349, 1
                $region60: #{adj_decoder_forward.3} parent=46 // loop_footer_branch
                  %348 = sbr.rel target = $region56
                $region61: #{adj_decoder_forward.3} parent=46 // loop_exit
                  _
              $region47: #{adj_decoder_forward.3} parent=31 // pred_fallthru
                _
              %p380 = pneg %p185
              // Predicated region
              $region62: #{adj_decoder_forward.3} parent=31 // pred_check
                _
              $region63: #{adj_decoder_forward.3} parent=31 // pred_check_branch
                %382 = sbr.rel (%p185) target = $region65
              $region64: #{adj_decoder_forward.3} parent=31 // pred_region
                %s383 = sand.u32 %s148, 7
                %s384 = ssub.s32 %s148, %s383
                %s385 = scalar_lea.vmem %s147, %s384
                %s386 = ssub.s32 %s148, %s383
                %s387 = scalar_lea.vmem %s139, %s386 [#allocation2]
                %s388 = sshrl.u32 %s148, 3
                %s389 = sshrl.u32 %s388, 3
                // While loop
                $region66: #{adj_decoder_forward.3} parent=64 // loop_pre_header
                  _
                $region67: #{adj_decoder_forward.3} parent=64 // loop_header
                  %s393 = sphi 0, %s395
                  %p394 = scmp.ge.s32.totalorder %s393, %s389
                  %s398 = sphi 0, %s531
                  %s399 = sphi %s147, %s534
                  %s400 = sphi %s139, %s535
                $region68: #{adj_decoder_forward.3} parent=64 // loop_header_branch
                  %397 = sbr.rel (%p394) target = $region72
                $region69: #{adj_decoder_forward.3} parent=64 // loop_body
                  %v401 = vld [vmem:[%s399] sm:$0xff]
                  %402 = vst [vmem:[%s400] sm:$0xff] %v401
                  %v403 = vld [vmem:[%s399 + $0x8] sm:$0xff]
                  %404 = vst [vmem:[%s400 + $0x8] sm:$0xff] %v403
                  %v405 = vld [vmem:[%s399 + $0x10] sm:$0xff]
                  %406 = vst [vmem:[%s400 + $0x10] sm:$0xff] %v405
                  %v407 = vld [vmem:[%s399 + $0x18] sm:$0xff]
                  %408 = vst [vmem:[%s400 + $0x18] sm:$0xff] %v407
                  %v409 = vld [vmem:[%s399 + $0x20] sm:$0xff]
                  %410 = vst [vmem:[%s400 + $0x20] sm:$0xff] %v409
                  %v411 = vld [vmem:[%s399 + $0x28] sm:$0xff]
                  %412 = vst [vmem:[%s400 + $0x28] sm:$0xff] %v411
                  %v413 = vld [vmem:[%s399 + $0x30] sm:$0xff]
                  %414 = vst [vmem:[%s400 + $0x30] sm:$0xff] %v413
                  %v415 = vld [vmem:[%s399 + $0x38] sm:$0xff]
                  %416 = vst [vmem:[%s400 + $0x38] sm:$0xff] %v415
                  %v417 = vld [vmem:[%s399 + $0x28] sm:$0xff]
                  %418 = vst [vmem:[%s400 + $0x10] sm:$0xff] %v417
                  %v419 = vld [vmem:[%s399 + $0x30] sm:$0xff]
                  %420 = vst [vmem:[%s400 + $0x18] sm:$0xff] %v419
                  %v421 = vld [vmem:[%s399 + $0x38] sm:$0xff]
                  %422 = vst [vmem:[%s400 + $0x20] sm:$0xff] %v421
                  %v423 = vld [vmem:[%s399 + $0x40] sm:$0xff]
                  %424 = vst [vmem:[%s400 + $0x28] sm:$0xff] %v423
                  %v425 = vld [vmem:[%s399 + $0x48] sm:$0xff]
                  %426 = vst [vmem:[%s400 + $0x30] sm:$0xff] %v425
                  %v427 = vld [vmem:[%s399 + $0x50] sm:$0xff]
                  %428 = vst [vmem:[%s400 + $0x38] sm:$0xff] %v427
                  %v429 = vld [vmem:[%s399 + $0x58] sm:$0xff]
                  %430 = vst [vmem:[%s400 + $0x40] sm:$0xff] %v429
                  %v431 = vld [vmem:[%s399 + $0x60] sm:$0xff]
                  %432 = vst [vmem:[%s400 + $0x48] sm:$0xff] %v431
                  %v433 = vld [vmem:[%s399 + $0x50] sm:$0xff]
                  %434 = vst [vmem:[%s400 + $0x20] sm:$0xff] %v433
                  %v435 = vld [vmem:[%s399 + $0x58] sm:$0xff]
                  %436 = vst [vmem:[%s400 + $0x28] sm:$0xff] %v435
                  %v437 = vld [vmem:[%s399 + $0x60] sm:$0xff]
                  %438 = vst [vmem:[%s400 + $0x30] sm:$0xff] %v437
                  %v439 = vld [vmem:[%s399 + $0x68] sm:$0xff]
                  %440 = vst [vmem:[%s400 + $0x38] sm:$0xff] %v439
                  %v441 = vld [vmem:[%s399 + $0x70] sm:$0xff]
                  %442 = vst [vmem:[%s400 + $0x40] sm:$0xff] %v441
                  %v443 = vld [vmem:[%s399 + $0x78] sm:$0xff]
                  %444 = vst [vmem:[%s400 + $0x48] sm:$0xff] %v443
                  %v445 = vld [vmem:[%s399 + $0x80] sm:$0xff]
                  %446 = vst [vmem:[%s400 + $0x50] sm:$0xff] %v445
                  %v447 = vld [vmem:[%s399 + $0x88] sm:$0xff]
                  %448 = vst [vmem:[%s400 + $0x58] sm:$0xff] %v447
                  %v449 = vld [vmem:[%s399 + $0x78] sm:$0xff]
                  %450 = vst [vmem:[%s400 + $0x30] sm:$0xff] %v449
                  %v451 = vld [vmem:[%s399 + $0x80] sm:$0xff]
                  %452 = vst [vmem:[%s400 + $0x38] sm:$0xff] %v451
                  %v453 = vld [vmem:[%s399 + $0x88] sm:$0xff]
                  %454 = vst [vmem:[%s400 + $0x40] sm:$0xff] %v453
                  %v455 = vld [vmem:[%s399 + $0x90] sm:$0xff]
                  %456 = vst [vmem:[%s400 + $0x48] sm:$0xff] %v455
                  %v457 = vld [vmem:[%s399 + $0x98] sm:$0xff]
                  %458 = vst [vmem:[%s400 + $0x50] sm:$0xff] %v457
                  %v459 = vld [vmem:[%s399 + $0xa0] sm:$0xff]
                  %460 = vst [vmem:[%s400 + $0x58] sm:$0xff] %v459
                  %v461 = vld [vmem:[%s399 + $0xa8] sm:$0xff]
                  %462 = vst [vmem:[%s400 + $0x60] sm:$0xff] %v461
                  %v463 = vld [vmem:[%s399 + $0xb0] sm:$0xff]
                  %464 = vst [vmem:[%s400 + $0x68] sm:$0xff] %v463
                  %v465 = vld [vmem:[%s399 + $0xa0] sm:$0xff]
                  %466 = vst [vmem:[%s400 + $0x40] sm:$0xff] %v465
                  %v467 = vld [vmem:[%s399 + $0xa8] sm:$0xff]
                  %468 = vst [vmem:[%s400 + $0x48] sm:$0xff] %v467
                  %v469 = vld [vmem:[%s399 + $0xb0] sm:$0xff]
                  %470 = vst [vmem:[%s400 + $0x50] sm:$0xff] %v469
                  %v471 = vld [vmem:[%s399 + $0xb8] sm:$0xff]
                  %472 = vst [vmem:[%s400 + $0x58] sm:$0xff] %v471
                  %v473 = vld [vmem:[%s399 + $0xc0] sm:$0xff]
                  %474 = vst [vmem:[%s400 + $0x60] sm:$0xff] %v473
                  %v475 = vld [vmem:[%s399 + $0xc8] sm:$0xff]
                  %476 = vst [vmem:[%s400 + $0x68] sm:$0xff] %v475
                  %v477 = vld [vmem:[%s399 + $0xd0] sm:$0xff]
                  %478 = vst [vmem:[%s400 + $0x70] sm:$0xff] %v477
                  %v479 = vld [vmem:[%s399 + $0xd8] sm:$0xff]
                  %480 = vst [vmem:[%s400 + $0x78] sm:$0xff] %v479
                  %v481 = vld [vmem:[%s399 + $0xc8] sm:$0xff]
                  %482 = vst [vmem:[%s400 + $0x50] sm:$0xff] %v481
                  %v483 = vld [vmem:[%s399 + $0xd0] sm:$0xff]
                  %484 = vst [vmem:[%s400 + $0x58] sm:$0xff] %v483
                  %v485 = vld [vmem:[%s399 + $0xd8] sm:$0xff]
                  %486 = vst [vmem:[%s400 + $0x60] sm:$0xff] %v485
                  %v487 = vld [vmem:[%s399 + $0xe0] sm:$0xff]
                  %488 = vst [vmem:[%s400 + $0x68] sm:$0xff] %v487
                  %v489 = vld [vmem:[%s399 + $0xe8] sm:$0xff]
                  %490 = vst [vmem:[%s400 + $0x70] sm:$0xff] %v489
                  %v491 = vld [vmem:[%s399 + $0xf0] sm:$0xff]
                  %492 = vst [vmem:[%s400 + $0x78] sm:$0xff] %v491
                  %v493 = vld [vmem:[%s399 + $0xf8] sm:$0xff]
                  %494 = vst [vmem:[%s400 + $0x80] sm:$0xff] %v493
                  %v495 = vld [vmem:[%s399 + $0x100] sm:$0xff]
                  %496 = vst [vmem:[%s400 + $0x88] sm:$0xff] %v495
                  %v497 = vld [vmem:[%s399 + $0xf0] sm:$0xff]
                  %498 = vst [vmem:[%s400 + $0x60] sm:$0xff] %v497
                  %v499 = vld [vmem:[%s399 + $0xf8] sm:$0xff]
                  %500 = vst [vmem:[%s400 + $0x68] sm:$0xff] %v499
                  %v501 = vld [vmem:[%s399 + $0x100] sm:$0xff]
                  %502 = vst [vmem:[%s400 + $0x70] sm:$0xff] %v501
                  %v503 = vld [vmem:[%s399 + $0x108] sm:$0xff]
                  %504 = vst [vmem:[%s400 + $0x78] sm:$0xff] %v503
                  %v505 = vld [vmem:[%s399 + $0x110] sm:$0xff]
                  %506 = vst [vmem:[%s400 + $0x80] sm:$0xff] %v505
                  %v507 = vld [vmem:[%s399 + $0x118] sm:$0xff]
                  %508 = vst [vmem:[%s400 + $0x88] sm:$0xff] %v507
                  %v509 = vld [vmem:[%s399 + $0x120] sm:$0xff]
                  %510 = vst [vmem:[%s400 + $0x90] sm:$0xff] %v509
                  %v511 = vld [vmem:[%s399 + $0x128] sm:$0xff]
                  %512 = vst [vmem:[%s400 + $0x98] sm:$0xff] %v511
                  %v513 = vld [vmem:[%s399 + $0x118] sm:$0xff]
                  %514 = vst [vmem:[%s400 + $0x70] sm:$0xff] %v513
                  %v515 = vld [vmem:[%s399 + $0x120] sm:$0xff]
                  %516 = vst [vmem:[%s400 + $0x78] sm:$0xff] %v515
                  %v517 = vld [vmem:[%s399 + $0x128] sm:$0xff]
                  %518 = vst [vmem:[%s400 + $0x80] sm:$0xff] %v517
                  %v519 = vld [vmem:[%s399 + $0x130] sm:$0xff]
                  %520 = vst [vmem:[%s400 + $0x88] sm:$0xff] %v519
                  %v521 = vld [vmem:[%s399 + $0x138] sm:$0xff]
                  %522 = vst [vmem:[%s400 + $0x90] sm:$0xff] %v521
                  %v523 = vld [vmem:[%s399 + $0x140] sm:$0xff]
                  %524 = vst [vmem:[%s400 + $0x98] sm:$0xff] %v523
                  %v525 = vld [vmem:[%s399 + $0x148] sm:$0xff]
                  %526 = vst [vmem:[%s400 + $0xa0] sm:$0xff] %v525
                  %v527 = vld [vmem:[%s399 + $0x150] sm:$0xff]
                  %528 = vst [vmem:[%s400 + $0xa8] sm:$0xff] %v527
                  %s529 = sadd.s32 1, %s398
                  %p530 = scmp.ge.s32.totalorder %s529, %s389
                  %s531 = scalar_select %p530, 0, %s529
                  %s532 = smul.u32 %s531, 64
                  %s533 = smul.u32 %s531, 64
                  %s534 = scalar_lea.vmem %s147, %s532
                  %s535 = scalar_lea.vmem %s139, %s533 [#allocation2]
                $region70: #{adj_decoder_forward.3} parent=64 // loop_footer
                  %s395 = sadd.s32 %s393, 1
                $region71: #{adj_decoder_forward.3} parent=64 // loop_footer_branch
                  %392 = sbr.rel target = $region67
                $region72: #{adj_decoder_forward.3} parent=64 // loop_exit
                  _
                %s536 = sshrl.u32 %s388, 3
                %s537 = sand.u32 %s388, 7
                %s538 = smul.u32 %s536, 8
                %s539 = smul.u32 128, %s538
                %s540 = sshra.s32 %s539, 4
                %s541 = scalar_lea.vmem %s147, %s540
                %s542 = smul.u32 128, %s538
                %s543 = sshra.s32 %s542, 4
                %s544 = scalar_lea.vmem %s139, %s543 [#allocation2]
                // While loop
                $region73: #{adj_decoder_forward.3} parent=64 // loop_pre_header
                  _
                $region74: #{adj_decoder_forward.3} parent=64 // loop_header
                  %s548 = sphi 0, %s550
                  %p549 = scmp.ge.s32.totalorder %s548, %s537
                  %s553 = sphi 0, %s574
                  %s554 = sphi %s541, %s577
                  %s555 = sphi %s544, %s578
                $region75: #{adj_decoder_forward.3} parent=64 // loop_header_branch
                  %552 = sbr.rel (%p549) target = $region79
                $region76: #{adj_decoder_forward.3} parent=64 // loop_body
                  %v556 = vld [vmem:[%s554] sm:$0xff]
                  %557 = vst [vmem:[%s555] sm:$0xff] %v556
                  %v558 = vld [vmem:[%s554 + $0x28] sm:$0xff]
                  %559 = vst [vmem:[%s555 + $0x10] sm:$0xff] %v558
                  %v560 = vld [vmem:[%s554 + $0x50] sm:$0xff]
                  %561 = vst [vmem:[%s555 + $0x20] sm:$0xff] %v560
                  %v562 = vld [vmem:[%s554 + $0x78] sm:$0xff]
                  %563 = vst [vmem:[%s555 + $0x30] sm:$0xff] %v562
                  %v564 = vld [vmem:[%s554 + $0xa0] sm:$0xff]
                  %565 = vst [vmem:[%s555 + $0x40] sm:$0xff] %v564
                  %v566 = vld [vmem:[%s554 + $0xc8] sm:$0xff]
                  %567 = vst [vmem:[%s555 + $0x50] sm:$0xff] %v566
                  %v568 = vld [vmem:[%s554 + $0xf0] sm:$0xff]
                  %569 = vst [vmem:[%s555 + $0x60] sm:$0xff] %v568
                  %v570 = vld [vmem:[%s554 + $0x118] sm:$0xff]
                  %571 = vst [vmem:[%s555 + $0x70] sm:$0xff] %v570
                  %s572 = sadd.s32 1, %s553
                  %p573 = scmp.ge.s32.totalorder %s572, %s537
                  %s574 = scalar_select %p573, 0, %s572
                  %s575 = smul.u32 %s574, 8
                  %s576 = smul.u32 %s574, 8
                  %s577 = scalar_lea.vmem %s541, %s575
                  %s578 = scalar_lea.vmem %s544, %s576 [#allocation2]
                $region77: #{adj_decoder_forward.3} parent=64 // loop_footer
                  %s550 = sadd.s32 %s548, 1
                $region78: #{adj_decoder_forward.3} parent=64 // loop_footer_branch
                  %547 = sbr.rel target = $region74
                $region79: #{adj_decoder_forward.3} parent=64 // loop_exit
                  _
                %s579 = sshllo.u32 0, %s383
                loop: start=0, step=1, limit=1
                $region80: #{adj_decoder_forward.3} parent=64 // loop_pre_header
                  _
                $region81: #{adj_decoder_forward.3} parent=64 // loop_header
                  %s581 = sphi 0, %s585
                  %p582 = scmp.ge.s32.totalorder %s581, 1
                  %s586 = sphi %s385, %s385
                  %s587 = sphi %s387, %s387
                $region82: #{adj_decoder_forward.3} parent=64 // loop_header_branch
                  %584 = sbr.rel (%p582) target = $region86
                $region83: #{adj_decoder_forward.3} parent=64 // loop_body
                  %v588 = vld [vmem:[%s586] sm:%s579]
                  %589 = vst [vmem:[%s587] sm:%s579] %v588
                  %v590 = vld [vmem:[%s586 + $0x28] sm:%s579]
                  %591 = vst [vmem:[%s587 + $0x10] sm:%s579] %v590
                  %v592 = vld [vmem:[%s586 + $0x50] sm:%s579]
                  %593 = vst [vmem:[%s587 + $0x20] sm:%s579] %v592
                  %v594 = vld [vmem:[%s586 + $0x78] sm:%s579]
                  %595 = vst [vmem:[%s587 + $0x30] sm:%s579] %v594
                  %v596 = vld [vmem:[%s586 + $0xa0] sm:%s579]
                  %597 = vst [vmem:[%s587 + $0x40] sm:%s579] %v596
                  %v598 = vld [vmem:[%s586 + $0xc8] sm:%s579]
                  %599 = vst [vmem:[%s587 + $0x50] sm:%s579] %v598
                  %v600 = vld [vmem:[%s586 + $0xf0] sm:%s579]
                  %601 = vst [vmem:[%s587 + $0x60] sm:%s579] %v600
                  %v602 = vld [vmem:[%s586 + $0x118] sm:%s579]
                  %603 = vst [vmem:[%s587 + $0x70] sm:%s579] %v602
                $region84: #{adj_decoder_forward.3} parent=64 // loop_footer
                  %s585 = sadd.s32 1, %s581
                $region85: #{adj_decoder_forward.3} parent=64 // loop_footer_branch
                  %580 = sbr.rel target = $region81
                $region86: #{adj_decoder_forward.3} parent=64 // loop_exit
                  _
              $region65: #{adj_decoder_forward.3} parent=31 // pred_fallthru
                _
            $region32: #{adj_decoder_forward.3} parent=27 // pred_fallthru
              _
            // Predicated region
            $region33: #{adj_decoder_forward.3} parent=27 // pred_check
              %p156 = pneg %p152
            $region34: #{adj_decoder_forward.3} parent=27 // pred_check_branch
              %158 = sbr.rel (%p156) target = $region36
            $region35: #{adj_decoder_forward.3} parent=27 // pred_region
              %s159 = sshllo.u32 0, %s148
              loop: start=0, step=1, limit=1
              $region37: #{adj_decoder_forward.3} parent=35 // loop_pre_header
                _
              $region38: #{adj_decoder_forward.3} parent=35 // loop_header
                %s161 = sphi 0, %s165
                %p162 = scmp.ge.s32.totalorder %s161, 1
                %s166 = sphi %s147, %s147
                %s167 = sphi %s139, %s139
              $region39: #{adj_decoder_forward.3} parent=35 // loop_header_branch
                %164 = sbr.rel (%p162) target = $region43
              $region40: #{adj_decoder_forward.3} parent=35 // loop_body
                %v168 = vld [vmem:[%s166] sm:%s159]
                %169 = vst [vmem:[%s167] sm:%s159] %v168
                %v170 = vld [vmem:[%s166 + $0x28] sm:%s159]
                %171 = vst [vmem:[%s167 + $0x10] sm:%s159] %v170
                %v172 = vld [vmem:[%s166 + $0x50] sm:%s159]
                %173 = vst [vmem:[%s167 + $0x20] sm:%s159] %v172
                %v174 = vld [vmem:[%s166 + $0x78] sm:%s159]
                %175 = vst [vmem:[%s167 + $0x30] sm:%s159] %v174
                %v176 = vld [vmem:[%s166 + $0xa0] sm:%s159]
                %177 = vst [vmem:[%s167 + $0x40] sm:%s159] %v176
                %v178 = vld [vmem:[%s166 + $0xc8] sm:%s159]
                %179 = vst [vmem:[%s167 + $0x50] sm:%s159] %v178
                %v180 = vld [vmem:[%s166 + $0xf0] sm:%s159]
                %181 = vst [vmem:[%s167 + $0x60] sm:%s159] %v180
                %v182 = vld [vmem:[%s166 + $0x118] sm:%s159]
                %183 = vst [vmem:[%s167 + $0x70] sm:%s159] %v182
              $region41: #{adj_decoder_forward.3} parent=35 // loop_footer
                %s165 = sadd.s32 1, %s161
              $region42: #{adj_decoder_forward.3} parent=35 // loop_footer_branch
                %160 = sbr.rel target = $region38
              $region43: #{adj_decoder_forward.3} parent=35 // loop_exit
                _
            $region36: #{adj_decoder_forward.3} parent=27 // pred_fallthru
              _
          $region28: #{adj_decoder_forward.3} parent=23 // pred_fallthru
            _
          %604 = vnop
        $region24: #{adj_decoder_forward.3} parent=19 // pred_fallthru
          _
        // Predicated region
        $region87: #{adj_decoder_forward.3} parent=19 // pred_check
          %p605 = pneg %p79
        $region88: #{adj_decoder_forward.3} parent=19 // pred_check_branch
          %607 = sbr.rel (%p605) target = $region90
        $region89: #{adj_decoder_forward.3} parent=19 // pred_region
          %s608 = smul.u32 4, %s12
          %s609 = ssub.s32 10, %s608
          %p610 = scmp.lt.s32.totalorder %s609, 4
          %s611 = scalar_select %p610, %s609, 4
          %s612 = smul.u32 16, %s611
          %p613 = scmp.lt.s32.totalorder %s608, 9
          %s614 = scalar_select %p613, %s608, 9
          %s615 = scalar_lea.vmem %s2, %s614
          %s616 = smul.u32 4, %s12
          %s617 = ssub.s32 10, %s616
          %p618 = scmp.lt.s32.totalorder %s617, 4
          %s619 = scalar_select %p618, %s617, 4
          %s620 = smul.u32 16, %s619
        $region90: #{adj_decoder_forward.3} parent=19 // pred_fallthru
          _
      $region20: #{adj_decoder_forward.3} parent=5 // pred_fallthru
        _
      %p621 = scmp.le.s32.totalorder 1, %s12
      %p622 = scmp.lt.s32.totalorder %s12, 4
      %p623 = pnand %p621, %p622
      %p624 = pneg %p623
      // Predicated region
      $region91: #{adj_decoder_forward.3} parent=5 // pred_check
        _
      $region92: #{adj_decoder_forward.3} parent=5 // pred_check_branch
        %626 = sbr.rel (%p623) target = $region94
      $region93: #{adj_decoder_forward.3} parent=5 // pred_region
        %s627 = ssub.s32 %s12, 1
        %s628 = sand.u32 %s46, 1
        %s629 = sand.u32 %s46, 1
        %s630 = smul.addr %s629, 128
        %s631 = scalar_lea.vmem [#allocation2], %s630
        // Predicated region
        $region95: #{adj_decoder_forward.3} parent=93 // pred_check
          %p632 = pneg %p59
        $region96: #{adj_decoder_forward.3} parent=93 // pred_check_branch
          %634 = sbr.rel (%p632) target = $region98
        $region97: #{adj_decoder_forward.3} parent=93 // pred_region
          _
        $region98: #{adj_decoder_forward.3} parent=93 // pred_fallthru
          _
        %p635 = pneg %p33
        %p636 = pneg %p30
        %s637 = sand.u32 %s46, 1
        %s638 = sand.u32 %s46, 1
        %s639 = smul.addr %s638, 128
        %s640 = scalar_lea.vmem [#allocation2], %s639
        %p641 = pneg %p59
        %p642 = pneg %p56
        %s643 = smul.u32 4, %s17
        %s644 = ssub.s32 10, %s643
        %p645 = scmp.lt.s32.totalorder %s644, 4
        %s646 = scalar_select %p645, %s644, 4
        %s647 = smul.u32 16, %s646
        %p648 = scmp.lt.s32.totalorder %s643, 9
        %s649 = scalar_select %p648, %s643, 9
        %s650 = scalar_lea.vmem %s2, %s649
        %p651 = pneg %p85
        %p652 = pneg %p82
        %p653 = pneg %p111
        %p654 = pneg %p108
        %s655 = sand.u32 %s98, 1
        %s656 = scalar_lea.sflag [#allocation4], %s655
        %s657 = sand.u32 %s98, 1
        %s658 = smul.addr %s657, 32
        %s659 = scalar_lea.vmem [#allocation3], %s658
        %s660 = smul.u32 4, %s17
        %s661 = ssub.s32 10, %s660
        %p662 = scmp.lt.s32.totalorder %s661, 4
        %s663 = scalar_select %p662, %s661, 4
        %s664 = smul.u32 512, %s663
        %s665 = smul.u32 4, %s17
        %s666 = ssub.s32 10, %s665
        %p667 = scmp.lt.s32.totalorder %s666, 4
        %s668 = scalar_select %p667, %s666, 4
        %s669 = smul.u32 16, %s668
        %p670 = scmp.lt.s32.totalorder %s665, 9
        %s671 = scalar_select %p670, %s665, 9
        %s672 = scalar_lea.vmem %s2, %s671
        %s673 = smul.u32 4, %s17
        %s674 = ssub.s32 10, %s673
        %p675 = scmp.lt.s32.totalorder %s674, 4
        %s676 = scalar_select %p675, %s674, 4
        %s677 = smul.u32 16, %s676
        %s678 = smul.u32 4, %s17
        %s679 = ssub.s32 10, %s678
        %p680 = scmp.lt.s32.totalorder %s679, 4
        %s681 = scalar_select %p680, %s679, 4
        %s682 = smul.u32 128, %s681
        %v684 = vld [vmem:[%s0] sm:$0xff]
        %v685 = vpack.c.bf16 %v684, %v684
        %v686 = vld [vmem:[%s631] sm:$0xff]
        %v687 = vld [vmem:[%s631 + $0x8] sm:$0xff]
        %v688 = vld [vmem:[%s631 + $0x10] sm:$0xff]
        %v689 = vld [vmem:[%s631 + $0x18] sm:$0xff]
        %v690 = vld [vmem:[%s631 + $0x20] sm:$0xff]
        %v691 = vld [vmem:[%s631 + $0x28] sm:$0xff]
        %v692 = vld [vmem:[%s631 + $0x30] sm:$0xff]
        %v693 = vld [vmem:[%s631 + $0x38] sm:$0xff]
        %v694 = vld [vmem:[%s631 + $0x40] sm:$0xff]
        %v695 = vld [vmem:[%s631 + $0x48] sm:$0xff]
        %v696 = vld [vmem:[%s631 + $0x50] sm:$0xff]
        %v697 = vld [vmem:[%s631 + $0x58] sm:$0xff]
        %v698 = vld [vmem:[%s631 + $0x60] sm:$0xff]
        %v699 = vld [vmem:[%s631 + $0x68] sm:$0xff]
        %v700 = vld [vmem:[%s631 + $0x70] sm:$0xff]
        %v701 = vld [vmem:[%s631 + $0x78] sm:$0xff]
        %v702 = vld [vmem:[%s672] sm:$0xf]
        %v704 = vlaneseq
        %v705 = vshrl.u32 %v704, 7
        %v706 = vsub.s32 0, %v705
        %v707 = vrot.slane %v702, %v706
        %v708 = vlaneseq
        %v709 = vshrl.u32 %v708, 7
        %v710 = vsub.s32 1, %v709
        %v711 = vrot.slane %v702, %v710
        %v712 = vlaneseq
        %v713 = vshrl.u32 %v712, 7
        %v714 = vsub.s32 2, %v713
        %v715 = vrot.slane %v702, %v714
        %v716 = vlaneseq
        %v717 = vshrl.u32 %v716, 7
        %v718 = vsub.s32 3, %v717
        %v719 = vrot.slane %v702, %v718
        %v740 = vunpack.c.l.b16 %v686
        %v741 = vunpack.c.h.b16 %v686
        %v742 = vunpack.c.l.b16 %v687
        %v743 = vunpack.c.h.b16 %v687
        %v744 = vunpack.c.l.b16 %v688
        %v745 = vunpack.c.h.b16 %v688
        %v746 = vunpack.c.l.b16 %v689
        %v747 = vunpack.c.h.b16 %v689
        %v748 = vunpack.c.l.b16 %v690
        %v749 = vunpack.c.h.b16 %v690
        %v750 = vunpack.c.l.b16 %v691
        %v751 = vunpack.c.h.b16 %v691
        %v752 = vunpack.c.l.b16 %v692
        %v753 = vunpack.c.h.b16 %v692
        %v754 = vunpack.c.l.b16 %v693
        %v755 = vunpack.c.h.b16 %v693
        %v756 = vunpack.c.l.b16 %v694
        %v757 = vunpack.c.h.b16 %v694
        %v758 = vunpack.c.l.b16 %v695
        %v759 = vunpack.c.h.b16 %v695
        %v760 = vunpack.c.l.b16 %v696
        %v761 = vunpack.c.h.b16 %v696
        %v762 = vunpack.c.l.b16 %v697
        %v763 = vunpack.c.h.b16 %v697
        %v764 = vunpack.c.l.b16 %v698
        %v765 = vunpack.c.h.b16 %v698
        %v766 = vunpack.c.l.b16 %v699
        %v767 = vunpack.c.h.b16 %v699
        %v768 = vunpack.c.l.b16 %v700
        %v769 = vunpack.c.h.b16 %v700
        %v770 = vunpack.c.l.b16 %v701
        %v771 = vunpack.c.h.b16 %v701
        %v772 = vpack.c.b16 %v744, %v740
        %v773 = vpack.c.b16 %v745, %v741
        %v774 = vpack.c.b16 %v746, %v742
        %v775 = vpack.c.b16 %v747, %v743
        %v776 = vpack.c.b16 %v752, %v748
        %v777 = vpack.c.b16 %v753, %v749
        %v778 = vpack.c.b16 %v754, %v750
        %v779 = vpack.c.b16 %v755, %v751
        %v780 = vpack.c.b16 %v760, %v756
        %v781 = vpack.c.b16 %v761, %v757
        %v782 = vpack.c.b16 %v762, %v758
        %v783 = vpack.c.b16 %v763, %v759
        %v784 = vpack.c.b16 %v768, %v764
        %v785 = vpack.c.b16 %v769, %v765
        %v786 = vpack.c.b16 %v770, %v766
        %v787 = vpack.c.b16 %v771, %v767
        %vm804 = vcmask 523264
        %v806 = vsel %vm804, %v685, 0
        %808 = vmatprep.subr.bf16.mxu0 %v773
        %809 = vmatpush1.bf16.msra.mxu0 %v772
        %810 = vmatprep.subr.bf16.mxu0 %v777
        %811 = vmatpush1.bf16.msra.mxu0 %v776
        %812 = vmatprep.subr.bf16.mxu0 %v781
        %813 = vmatpush1.bf16.msra.mxu0 %v780
        %814 = vmatprep.subr.bf16.mxu0 %v785
        %815 = vmatpush1.bf16.msra.mxu0 %v784
        %816 = vmatprep.subr.bf16.mxu0 0
        %817 = vmatpush1.bf16.msra.mxu0 0
        %818 = vmatprep.subr.bf16.mxu0 0
        %819 = vmatpush1.bf16.msra.mxu0 0
        %820 = vmatprep.subr.bf16.mxu0 0
        %821 = vmatpush1.bf16.msra.mxu0 0
        %822 = vmatprep.subr.bf16.mxu0 0
        %823 = vmatpush1.bf16.msra.mxu0 0
        %824 = vmatprep.subr.bf16.mxu0 0
        %825 = vmatpush1.bf16.msra.mxu0 0
        %826 = vmatprep.subr.bf16.mxu0 0
        %827 = vmatpush1.bf16.msra.mxu0 0
        %828 = vmatprep.subr.bf16.mxu0 0
        %829 = vmatpush1.bf16.msra.mxu0 0
        %830 = vmatprep.subr.bf16.mxu0 0
        %831 = vmatpush1.bf16.msra.mxu0 0
        %832 = vmatprep.subr.bf16.mxu0 0
        %833 = vmatpush1.bf16.msra.mxu0 0
        %834 = vmatprep.subr.bf16.mxu0 0
        %835 = vmatpush1.bf16.msra.mxu0 0
        %836 = vmatprep.subr.bf16.mxu0 0
        %837 = vmatpush1.bf16.msra.mxu0 0
        %838 = vmatprep.subr.bf16.mxu0 0
        %839 = vmatpush1.bf16.msra.mxu0 0
        %840 = vmatprep.mubr.bf16.mxu0 0
        %841 = vmatmul.mubr.bf16.gmra.mrb[0].mxu0 %v806
        %v842 = vpop.f32.mrb[0].mxu0
        %v843 = vadd.f32 %v707, %v842
        %v844 = vpop.f32.mrb[0].mxu0
        %v845 = vadd.f32 %v711, %v844
        %v846 = vpop.f32.mrb[0].mxu0
        %v847 = vpop.f32.mrb[0].mxu0
        %848 = vdwg.mxu0
        %849 = vmatprep.subr.bf16.mxu0 %v775
        %850 = vmatpush1.bf16.msra.mxu0 %v774
        %851 = vmatprep.subr.bf16.mxu0 %v779
        %852 = vmatpush1.bf16.msra.mxu0 %v778
        %853 = vmatprep.subr.bf16.mxu0 %v783
        %854 = vmatpush1.bf16.msra.mxu0 %v782
        %855 = vmatprep.subr.bf16.mxu0 %v787
        %856 = vmatpush1.bf16.msra.mxu0 %v786
        %857 = vmatprep.subr.bf16.mxu0 0
        %858 = vmatpush1.bf16.msra.mxu0 0
        %859 = vmatprep.subr.bf16.mxu0 0
        %860 = vmatpush1.bf16.msra.mxu0 0
        %861 = vmatprep.subr.bf16.mxu0 0
        %862 = vmatpush1.bf16.msra.mxu0 0
        %863 = vmatprep.subr.bf16.mxu0 0
        %864 = vmatpush1.bf16.msra.mxu0 0
        %865 = vmatprep.subr.bf16.mxu0 0
        %866 = vmatpush1.bf16.msra.mxu0 0
        %867 = vmatprep.subr.bf16.mxu0 0
        %868 = vmatpush1.bf16.msra.mxu0 0
        %869 = vmatprep.subr.bf16.mxu0 0
        %870 = vmatpush1.bf16.msra.mxu0 0
        %871 = vmatprep.subr.bf16.mxu0 0
        %872 = vmatpush1.bf16.msra.mxu0 0
        %873 = vmatprep.subr.bf16.mxu0 0
        %874 = vmatpush1.bf16.msra.mxu0 0
        %875 = vmatprep.subr.bf16.mxu0 0
        %876 = vmatpush1.bf16.msra.mxu0 0
        %877 = vmatprep.subr.bf16.mxu0 0
        %878 = vmatpush1.bf16.msra.mxu0 0
        %879 = vmatprep.subr.bf16.mxu0 0
        %880 = vmatpush1.bf16.msra.mxu0 0
        %881 = vmatprep.mubr.bf16.mxu0 0
        %882 = vmatmul.mubr.bf16.gmra.mrb[0].mxu0 %v806
        %v883 = vpop.f32.mrb[0].mxu0
        %v884 = vadd.f32 %v715, %v883
        %v885 = vpop.f32.mrb[0].mxu0
        %v886 = vadd.f32 %v719, %v885
        %v887 = vpop.f32.mrb[0].mxu0
        %v888 = vpop.f32.mrb[0].mxu0
        %889 = vdwg.mxu0
        %v890 = vxor.u32 %v843, 2147483648
        %v891 = vxor.u32 %v845, 2147483648
        %v892 = vxor.u32 %v884, 2147483648
        %v893 = vxor.u32 %v886, 2147483648
        %v894 = vmul.f32 %v890, 1.442695
        %v895 = vpow.pop %v894
        %v896 = vmul.f32 %v891, 1.442695
        %v897 = vpow.pop %v896
        %v898 = vmul.f32 %v892, 1.442695
        %v899 = vpow.pop %v898
        %v900 = vmul.f32 %v893, 1.442695
        %v901 = vpow.pop %v900
        %v902 = vadd.f32 %v895, 1.0
        %v903 = vadd.f32 %v897, 1.0
        %v904 = vadd.f32 %v899, 1.0
        %v905 = vadd.f32 %v901, 1.0
        %v906 = vrcp.pop %v902
        %v907 = vmul.f32 1.0, %v906
        %v908 = vrcp.pop %v903
        %v909 = vmul.f32 1.0, %v908
        %v910 = vrcp.pop %v904
        %v911 = vmul.f32 1.0, %v910
        %v912 = vrcp.pop %v905
        %v913 = vmul.f32 1.0, %v912
        %914 = vst [vmem:[%s659] sm:$0xff] %v907
        %915 = vst [vmem:[%s659 + $0x8] sm:$0xff] %v909
        %916 = vst [vmem:[%s659 + $0x10] sm:$0xff] %v911
        %917 = vst [vmem:[%s659 + $0x18] sm:$0xff] %v913
        %s918 = sand.u32 %s98, 1
        %s919 = scalar_lea.sflag [#allocation4], %s918
        %s920 = sand.u32 %s98, 1
        %s921 = smul.addr %s920, 32
        %s922 = scalar_lea.vmem [#allocation3], %s921
        // Predicated region
        $region99: #{adj_decoder_forward.3} parent=93 // pred_check
          %p923 = pneg %p108
        $region100: #{adj_decoder_forward.3} parent=93 // pred_check_branch
          %925 = sbr.rel (%p923) target = $region102
        $region101: #{adj_decoder_forward.3} parent=93 // pred_region
          %s926 = smul.u32 4, %s17
          %s927 = ssub.s32 10, %s926
          %p928 = scmp.lt.s32.totalorder %s927, 4
          %s929 = scalar_select %p928, %s927, 4
          %s930 = smul.u32 128, %s929
          %s932 = ssub.s32 512, %s930
          %933 = vsyncadd %s919, %s932
          %p934 = scmp.ne.s32.totalorder 0, %s930
          %s935 = smul.addr %s926, 128
          %s936 = scalar_lea.hbm %s3, %s935
          %s937 = smul.u32 %s929, 8
          %s938 = sshll.u32 %s937, 4
          %s939 = sshll.u32 %s922, 4
          %s940 = int_to_ptr.vmem [resolvable:$true] %s939
          %942 = dma.vmem_to_hbm [thread:$0]  (%p934), %s940, %s938, %s936, %s919
        $region102: #{adj_decoder_forward.3} parent=93 // pred_fallthru
          _
      $region94: #{adj_decoder_forward.3} parent=5 // pred_fallthru
        _
      %p943 = scmp.le.s32.totalorder 2, %s12
      // Predicated region
      $region103: #{adj_decoder_forward.3} parent=5 // pred_check
        %p944 = pneg %p943
      $region104: #{adj_decoder_forward.3} parent=5 // pred_check_branch
        %946 = sbr.rel (%p944) target = $region106
      $region105: #{adj_decoder_forward.3} parent=5 // pred_region
        %s947 = ssub.s32 %s12, 2
        // Predicated region
        $region107: #{adj_decoder_forward.3} parent=105 // pred_check
          %p948 = pneg %p114
        $region108: #{adj_decoder_forward.3} parent=105 // pred_check_branch
          %950 = sbr.rel (%p948) target = $region110
        $region109: #{adj_decoder_forward.3} parent=105 // pred_region
          %s951 = sand.u32 %s99, 1
          %s952 = scalar_lea.sflag [#allocation4], %s951
          %s953 = sand.u32 %s99, 1
          %s954 = smul.addr %s953, 32
          %s955 = scalar_lea.vmem [#allocation3], %s954
          %956 = dma.done %s952, 512
        $region110: #{adj_decoder_forward.3} parent=105 // pred_fallthru
          _
      $region106: #{adj_decoder_forward.3} parent=5 // pred_fallthru
        _
    $region6: #{adj_decoder_forward.3} parent=1 // loop_footer
      %s16 = sadd.s32 1, %s12
    $region7: #{adj_decoder_forward.3} parent=1 // loop_footer_branch
      %11 = sbr.rel target = $region3
    $region8: #{adj_decoder_forward.3} parent=1 // loop_exit
      _
    %957 = vsyncpa [#allocation4], 1
    %s958 = scalar_lea.sflag [#allocation4], 1
    %959 = vsyncpa %s958, 1

// kernel: adj_decoder_forward.2
$region0: #{adj_decoder_forward.2}
  #allocation0 [shape = 'u32[]', space=smem, size = 0x4, offset = 0x4, fixed_abs, tag = 'smem constant byte address 0x4 - core index']
  #allocation1 [shape = 'u32[144,128]{1,0:T(1,128)}', space=vmem, size = 0x12000, scoped, tag = 'internal scratch']
  %s0 = inlined_call_operand.vmem [shape: f32[8,32], index: 0, kind: input, shape index: {}]
  %s1 = inlined_call_operand.vmem [shape: f32[32,128], index: 1, kind: input, shape index: {}]
  %s2 = inlined_call_operand.vmem [shape: f32[1,128], index: 2, kind: input, shape index: {}]
  %s3 = inlined_call_operand.vmem [shape: f32[1,128], index: 3, kind: input, shape index: {}]
  %s4 = inlined_call_operand.vmem [shape: f32[1,128], index: 4, kind: input, shape index: {}]
  %s5 = inlined_call_operand.vmem [shape: f32[128,64], index: 5, kind: input, shape index: {}]
  %s6 = inlined_call_operand.vmem [shape: f32[1,64], index: 6, kind: input, shape index: {}]
  %s7 = inlined_call_operand.vmem [shape: f32[1,64], index: 7, kind: input, shape index: {}]
  %s8 = inlined_call_operand.vmem [shape: f32[1,64], index: 8, kind: input, shape index: {}]
  %s9 = inlined_call_operand.vmem [shape: f32[8,64], index: 9, kind: output, shape index: {}]
  %s10 = sld [smem:[#allocation0]]
  $region46: #{adj_decoder_forward.2} parent=0
    _
  %s12 = ssub.s32 1, %s10
  %s13 = scalar_select 0, %s12, %s10
  // Predicated region
  $region2: #{adj_decoder_forward.2} parent=0 // pred_check
    _
  $region3: #{adj_decoder_forward.2} parent=0 // pred_check_branch
    %15 = sbr.rel (0) target = $region5
  $region4: #{adj_decoder_forward.2} parent=0 // pred_region
    _
  $region5: #{adj_decoder_forward.2} parent=0 // pred_fallthru
    _
  // Predicated region
  $region6: #{adj_decoder_forward.2} parent=0 // pred_check
    _
  $region7: #{adj_decoder_forward.2} parent=0 // pred_check_branch
    %17 = sbr.rel (0) target = $region9
  $region8: #{adj_decoder_forward.2} parent=0 // pred_region
    _
  $region9: #{adj_decoder_forward.2} parent=0 // pred_fallthru
    _
  // Predicated region
  $region10: #{adj_decoder_forward.2} parent=0 // pred_check
    _
  $region11: #{adj_decoder_forward.2} parent=0 // pred_check_branch
    %19 = sbr.rel (0) target = $region13
  $region12: #{adj_decoder_forward.2} parent=0 // pred_region
    _
  $region13: #{adj_decoder_forward.2} parent=0 // pred_fallthru
    _
  // Predicated region
  $region14: #{adj_decoder_forward.2} parent=0 // pred_check
    _
  $region15: #{adj_decoder_forward.2} parent=0 // pred_check_branch
    %21 = sbr.rel (0) target = $region17
  $region16: #{adj_decoder_forward.2} parent=0 // pred_region
    _
  $region17: #{adj_decoder_forward.2} parent=0 // pred_fallthru
    _
  // Predicated region
  $region18: #{adj_decoder_forward.2} parent=0 // pred_check
    _
  $region19: #{adj_decoder_forward.2} parent=0 // pred_check_branch
    %23 = sbr.rel (0) target = $region21
  $region20: #{adj_decoder_forward.2} parent=0 // pred_region
    _
  $region21: #{adj_decoder_forward.2} parent=0 // pred_fallthru
    _
  // Predicated region
  $region22: #{adj_decoder_forward.2} parent=0 // pred_check
    _
  $region23: #{adj_decoder_forward.2} parent=0 // pred_check_branch
    %25 = sbr.rel (0) target = $region25
  $region24: #{adj_decoder_forward.2} parent=0 // pred_region
    _
  $region25: #{adj_decoder_forward.2} parent=0 // pred_fallthru
    _
  // Predicated region
  $region26: #{adj_decoder_forward.2} parent=0 // pred_check
    _
  $region27: #{adj_decoder_forward.2} parent=0 // pred_check_branch
    %27 = sbr.rel (0) target = $region29
  $region28: #{adj_decoder_forward.2} parent=0 // pred_region
    _
  $region29: #{adj_decoder_forward.2} parent=0 // pred_fallthru
    _
  // Predicated region
  $region30: #{adj_decoder_forward.2} parent=0 // pred_check
    _
  $region31: #{adj_decoder_forward.2} parent=0 // pred_check_branch
    %29 = sbr.rel (0) target = $region33
  $region32: #{adj_decoder_forward.2} parent=0 // pred_region
    _
  $region33: #{adj_decoder_forward.2} parent=0 // pred_fallthru
    _
  // Predicated region
  $region34: #{adj_decoder_forward.2} parent=0 // pred_check
    _
  $region35: #{adj_decoder_forward.2} parent=0 // pred_check_branch
    %31 = sbr.rel (0) target = $region37
  $region36: #{adj_decoder_forward.2} parent=0 // pred_region
    _
  $region37: #{adj_decoder_forward.2} parent=0 // pred_fallthru
    _
  %v32 = vld [vmem:[%s0] sm:$0xff]
  %v33 = vld [vmem:[%s1] sm:$0xff]
  %v34 = vld [vmem:[%s1 + $0x8] sm:$0xff]
  %v35 = vld [vmem:[%s1 + $0x10] sm:$0xff]
  %v36 = vld [vmem:[%s1 + $0x18] sm:$0xff]
  %v37 = vld [vmem:[%s2] sm:$0x1]
  %v38 = vld [vmem:[%s3] sm:$0x1]
  %v39 = vld [vmem:[%s4] sm:$0x1]
  %v41 = vlaneseq
  %v42 = vshrl.u32 %v41, 7
  %v43 = vsub.s32 0, %v42
  %v44 = vrot.slane %v37, %v43
  %vm46 = vcmask 261120
  %v48 = vsel %vm46, %v32, 0
  %50 = vmatprep.subr.mxu0 0.0
  %51 = vmatpush1.msra.mxu0 %v33
  %52 = vmatprep.subr.mxu0 0.0
  %53 = vmatpush1.msra.mxu0 %v34
  %54 = vmatprep.subr.mxu0 0.0
  %55 = vmatpush1.msra.mxu0 %v35
  %56 = vmatprep.subr.mxu0 0.0
  %57 = vmatpush1.msra.mxu0 %v36
  %58 = vmatprep.subr.mxu0 0.0
  %59 = vmatpush1.msra.mxu0 0.0
  %60 = vmatprep.subr.mxu0 0.0
  %61 = vmatpush1.msra.mxu0 0.0
  %62 = vmatprep.subr.mxu0 0.0
  %63 = vmatpush1.msra.mxu0 0.0
  %64 = vmatprep.subr.mxu0 0.0
  %65 = vmatpush1.msra.mxu0 0.0
  %66 = vmatprep.subr.mxu0 0.0
  %67 = vmatpush1.msra.mxu0 0.0
  %68 = vmatprep.subr.mxu0 0.0
  %69 = vmatpush1.msra.mxu0 0.0
  %70 = vmatprep.subr.mxu0 0.0
  %71 = vmatpush1.msra.mxu0 0.0
  %72 = vmatprep.subr.mxu0 0.0
  %73 = vmatpush1.msra.mxu0 0.0
  %74 = vmatprep.subr.mxu0 0.0
  %75 = vmatpush1.msra.mxu0 0.0
  %76 = vmatprep.subr.mxu0 0.0
  %77 = vmatpush1.msra.mxu0 0.0
  %78 = vmatprep.subr.mxu0 0.0
  %79 = vmatpush1.msra.mxu0 0.0
  %80 = vmatprep.subr.mxu0 0.0
  %81 = vmatpush1.msra.mxu0 0.0
  %82 = vmatprep.subr.mxu0 0.0
  %83 = vmatpush1.msra.mxu0 0.0
  %84 = vmatprep.subr.mxu0 0.0
  %85 = vmatpush1.msra.mxu0 0.0
  %86 = vmatprep.subr.mxu0 0.0
  %87 = vmatpush1.msra.mxu0 0.0
  %88 = vmatprep.subr.mxu0 0.0
  %89 = vmatpush1.msra.mxu0 0.0
  %90 = vmatprep.subr.mxu0 0.0
  %91 = vmatpush1.msra.mxu0 0.0
  %92 = vmatprep.subr.mxu0 0.0
  %93 = vmatpush1.msra.mxu0 0.0
  %94 = vmatprep.subr.mxu0 0.0
  %95 = vmatpush1.msra.mxu0 0.0
  %96 = vmatprep.subr.mxu0 0.0
  %97 = vmatpush1.msra.mxu0 0.0
  %98 = vmatprep.subr.mxu0 0.0
  %99 = vmatpush1.msra.mxu0 0.0
  %100 = vmatprep.subr.mxu0 0.0
  %101 = vmatpush1.msra.mxu0 0.0
  %102 = vmatprep.subr.mxu0 0.0
  %103 = vmatpush1.msra.mxu0 0.0
  %104 = vmatprep.subr.mxu0 0.0
  %105 = vmatpush1.msra.mxu0 0.0
  %106 = vmatprep.subr.mxu0 0.0
  %107 = vmatpush1.msra.mxu0 0.0
  %108 = vmatprep.subr.mxu0 0.0
  %109 = vmatpush1.msra.mxu0 0.0
  %110 = vmatprep.subr.mxu0 0.0
  %111 = vmatpush1.msra.mxu0 0.0
  %112 = vmatprep.subr.mxu0 0.0
  %113 = vmatpush1.msra.mxu0 0.0
  %114 = vmatprep.mubr.f32.mxu0 0.0
  %115 = vmatmul.mubr.f32.gmra.mrb[0].mxu0 %v48
  %v116 = vpop.f32.mrb[0].mxu0
  %v117 = vadd.f32 %v44, %v116
  %v118 = vpop.f32.mrb[0].mxu0
  %119 = vdwg.mxu0
  %v120 = vrot.slane %v117, 4
  %v121 = vadd.f32 %v117, %v120
  %v122 = vrot.slane %v121, 2
  %v123 = vadd.f32 %v121, %v122
  %v124 = vrot.slane %v123, 1
  %v125 = vadd.f32 %v123, %v124
  %v126 = vrcp.pop 8.0
  %v127 = vmul.f32 %v125, %v126
  %v128 = vsub.f32 %v117, %v127
  %v129 = vmul.f32 %v128, %v128
  %v130 = vrot.slane %v129, 4
  %v131 = vadd.f32 %v129, %v130
  %v132 = vrot.slane %v131, 2
  %v133 = vadd.f32 %v131, %v132
  %v134 = vrot.slane %v133, 1
  %v135 = vadd.f32 %v133, %v134
  %v136 = vmul.f32 %v135, %v126
  %v137 = vadd.f32 %v136, 0.001
  %v138 = vrsqrt.pop %v137
  %v139 = vmul.f32 %v38, %v138
  %v141 = vlaneseq
  %v142 = vshrl.u32 %v141, 7
  %v143 = vsub.s32 0, %v142
  %v144 = vrot.slane %v139, %v143
  %v146 = vmul.f32 %v117, %v144
  %v147 = vmul.f32 %v127, %v139
  %v148 = vsub.f32 %v39, %v147
  %v150 = vlaneseq
  %v151 = vshrl.u32 %v150, 7
  %v152 = vsub.s32 0, %v151
  %v153 = vrot.slane %v148, %v152
  %v155 = vadd.f32 %v146, %v153
  %156 = vadd.xlane.f32.xlu0 %v155
  %v157 = vpop.xlane.xlu0 %156
  %v158 = vrcp.pop 128.0
  %v159 = vmul.f32 %v157, %v158
  %v160 = vsub.f32 %v155, %v159
  %v161 = vmul.f32 %v160, %v160
  %162 = vadd.xlane.f32.xlu0 %v161
  %v163 = vpop.xlane.xlu0 %162
  %v164 = vmul.f32 %v163, %v158
  %v165 = vadd.f32 %v164, 1e-05
  %v166 = vrsqrt.pop %v165
  %v167 = vmul.f32 %v160, %v166
  %v168 = vmax.f32 %v167, 0.0
  %v169 = vld [vmem:[%s5] sm:$0xff]
  %v170 = vld [vmem:[%s5 + $0x8] sm:$0xff]
  %v171 = vld [vmem:[%s5 + $0x10] sm:$0xff]
  %v172 = vld [vmem:[%s5 + $0x18] sm:$0xff]
  %v173 = vld [vmem:[%s5 + $0x20] sm:$0xff]
  %v174 = vld [vmem:[%s5 + $0x28] sm:$0xff]
  %v175 = vld [vmem:[%s5 + $0x30] sm:$0xff]
  %v176 = vld [vmem:[%s5 + $0x38] sm:$0xff]
  %v177 = vld [vmem:[%s5 + $0x40] sm:$0xff]
  %v178 = vld [vmem:[%s5 + $0x48] sm:$0xff]
  %v179 = vld [vmem:[%s5 + $0x50] sm:$0xff]
  %v180 = vld [vmem:[%s5 + $0x58] sm:$0xff]
  %v181 = vld [vmem:[%s5 + $0x60] sm:$0xff]
  %v182 = vld [vmem:[%s5 + $0x68] sm:$0xff]
  %v183 = vld [vmem:[%s5 + $0x70] sm:$0xff]
  %v184 = vld [vmem:[%s5 + $0x78] sm:$0xff]
  %v185 = vld [vmem:[%s6] sm:$0x1]
  %v186 = vld [vmem:[%s7] sm:$0x1]
  %v187 = vld [vmem:[%s8] sm:$0x1]
  %v189 = vlaneseq
  %v190 = vshrl.u32 %v189, 7
  %v191 = vsub.s32 0, %v190
  %v192 = vrot.slane %v185, %v191
  %194 = vmatprep.subr.mxu0 0.0
  %195 = vmatpush1.msra.mxu0 %v169
  %196 = vmatprep.subr.mxu0 0.0
  %197 = vmatpush1.msra.mxu0 %v170
  %198 = vmatprep.subr.mxu0 0.0
  %199 = vmatpush1.msra.mxu0 %v171
  %200 = vmatprep.subr.mxu0 0.0
  %201 = vmatpush1.msra.mxu0 %v172
  %202 = vmatprep.subr.mxu0 0.0
  %203 = vmatpush1.msra.mxu0 %v173
  %204 = vmatprep.subr.mxu0 0.0
  %205 = vmatpush1.msra.mxu0 %v174
  %206 = vmatprep.subr.mxu0 0.0
  %207 = vmatpush1.msra.mxu0 %v175
  %208 = vmatprep.subr.mxu0 0.0
  %209 = vmatpush1.msra.mxu0 %v176
  %210 = vmatprep.subr.mxu0 0.0
  %211 = vmatpush1.msra.mxu0 %v177
  %212 = vmatprep.subr.mxu0 0.0
  %213 = vmatpush1.msra.mxu0 %v178
  %214 = vmatprep.subr.mxu0 0.0
  %215 = vmatpush1.msra.mxu0 %v179
  %216 = vmatprep.subr.mxu0 0.0
  %217 = vmatpush1.msra.mxu0 %v180
  %218 = vmatprep.subr.mxu0 0.0
  %219 = vmatpush1.msra.mxu0 %v181
  %220 = vmatprep.subr.mxu0 0.0
  %221 = vmatpush1.msra.mxu0 %v182
  %222 = vmatprep.subr.mxu0 0.0
  %223 = vmatpush1.msra.mxu0 %v183
  %224 = vmatprep.subr.mxu0 0.0
  %225 = vmatpush1.msra.mxu0 %v184
  %226 = vmatprep.subr.mxu0 0.0
  %227 = vmatpush1.msra.mxu0 0.0
  %228 = vmatprep.subr.mxu0 0.0
  %229 = vmatpush1.msra.mxu0 0.0
  %230 = vmatprep.subr.mxu0 0.0
  %231 = vmatpush1.msra.mxu0 0.0
  %232 = vmatprep.subr.mxu0 0.0
  %233 = vmatpush1.msra.mxu0 0.0
  %234 = vmatprep.subr.mxu0 0.0
  %235 = vmatpush1.msra.mxu0 0.0
  %236 = vmatprep.subr.mxu0 0.0
  %237 = vmatpush1.msra.mxu0 0.0
  %238 = vmatprep.subr.mxu0 0.0
  %239 = vmatpush1.msra.mxu0 0.0
  %240 = vmatprep.subr.mxu0 0.0
  %241 = vmatpush1.msra.mxu0 0.0
  %242 = vmatprep.subr.mxu0 0.0
  %243 = vmatpush1.msra.mxu0 0.0
  %244 = vmatprep.subr.mxu0 0.0
  %245 = vmatpush1.msra.mxu0 0.0
  %246 = vmatprep.subr.mxu0 0.0
  %247 = vmatpush1.msra.mxu0 0.0
  %248 = vmatprep.subr.mxu0 0.0
  %249 = vmatpush1.msra.mxu0 0.0
  %250 = vmatprep.subr.mxu0 0.0
  %251 = vmatpush1.msra.mxu0 0.0
  %252 = vmatprep.subr.mxu0 0.0
  %253 = vmatpush1.msra.mxu0 0.0
  %254 = vmatprep.subr.mxu0 0.0
  %255 = vmatpush1.msra.mxu0 0.0
  %256 = vmatprep.subr.mxu0 0.0
  %257 = vmatpush1.msra.mxu0 0.0
  %258 = vmatprep.mubr.f32.mxu0 0.0
  %259 = vmatmul.mubr.f32.gmra.mrb[0].mxu0 %v168
  %v260 = vpop.f32.mrb[0].mxu0
  %v261 = vadd.f32 %v192, %v260
  %v262 = vpop.f32.mrb[0].mxu0
  %263 = vdwg.mxu0
  %vm264 = vcmask 523264
  %v265 = vsel %vm264, %v261, 0.0
  %v266 = vrot.slane %v265, 4
  %v267 = vadd.f32 %v265, %v266
  %v268 = vrot.slane %v267, 2
  %v269 = vadd.f32 %v267, %v268
  %v270 = vrot.slane %v269, 1
  %v271 = vadd.f32 %v269, %v270
  %v272 = vmul.f32 %v271, %v126
  %v273 = vsub.f32 %v261, %v272
  %v274 = vmul.f32 %v273, %v273
  %v275 = vsel %vm264, %v274, 0.0
  %v276 = vrot.slane %v275, 4
  %v277 = vadd.f32 %v275, %v276
  %v278 = vrot.slane %v277, 2
  %v279 = vadd.f32 %v277, %v278
  %v280 = vrot.slane %v279, 1
  %v281 = vadd.f32 %v279, %v280
  %v282 = vmul.f32 %v281, %v126
  %v283 = vadd.f32 %v282, 0.001
  %v284 = vrsqrt.pop %v283
  %v285 = vmul.f32 %v186, %v284
  %v287 = vlaneseq
  %v288 = vshrl.u32 %v287, 7
  %v289 = vsub.s32 0, %v288
  %v290 = vrot.slane %v285, %v289
  %v292 = vmul.f32 %v261, %v290
  %v293 = vmul.f32 %v272, %v285
  %v294 = vsub.f32 %v187, %v293
  %v296 = vlaneseq
  %v297 = vshrl.u32 %v296, 7
  %v298 = vsub.s32 0, %v297
  %v299 = vrot.slane %v294, %v298
  %v301 = vadd.f32 %v292, %v299
  %v302 = vsel %vm264, %v301, 0.0
  %303 = vadd.xlane.f32.xlu0 %v302
  %v304 = vpop.xlane.xlu0 %303
  %v305 = vrcp.pop 64.0
  %v306 = vmul.f32 %v304, %v305
  %v307 = vsub.f32 %v301, %v306
  %v308 = vmul.f32 %v307, %v307
  %v309 = vsel %vm264, %v308, 0.0
  %310 = vadd.xlane.f32.xlu0 %v309
  %v311 = vpop.xlane.xlu0 %310
  %v312 = vmul.f32 %v311, %v305
  %v313 = vadd.f32 %v312, 1e-05
  %v314 = vrsqrt.pop %v313
  %v315 = vmul.f32 %v307, %v314
  %v316 = vmax.f32 %v315, 0.0
  %317 = vst.msk [vmem:[%s9] sm:$0xff] %vm264, %v316
  // Predicated region
  $region38: #{adj_decoder_forward.2} parent=0 // pred_check
    _
  $region39: #{adj_decoder_forward.2} parent=0 // pred_check_branch
    %319 = sbr.rel (0) target = $region41
  $region40: #{adj_decoder_forward.2} parent=0 // pred_region
    _
  $region41: #{adj_decoder_forward.2} parent=0 // pred_fallthru
    _
  // Predicated region
  $region42: #{adj_decoder_forward.2} parent=0 // pred_check
    _
  $region43: #{adj_decoder_forward.2} parent=0 // pred_check_branch
    %321 = sbr.rel (0) target = $region45
  $region44: #{adj_decoder_forward.2} parent=0 // pred_region
    _
  $region45: #{adj_decoder_forward.2} parent=0 // pred_fallthru
    _

</llo_original>
